<compile_context>
chip_gen: v7x
topology: tpu7x:2x2x1
jax: 0.10.0
libtpu: 0.0.40
codegen_flags: <defaults>
</compile_context>

<pallas_src>
import jax
import jax.numpy as jnp
from jax.experimental import pallas as pl
from jax.experimental.pallas import tpu as pltpu


def _round_up(v, m):
    return (v + m - 1) // m * m


def _make_lstm_kernel(n, bp, hp):
    """Kernel closed over static sizes: n timesteps, padded batch bp, padded hidden hp."""

    def kernel(x_ref, wih_ref, whh_ref, b_ref, wlin_ref, blin_ref, out_ref,
               gx_ref, hall_ref):
        # (1) Hoisted input projection for ALL timesteps, biases folded in:
        #     (n*bp, d) @ (d, 4*hp) + (1, 4*hp)  -> stored in VMEM scratch.
        gx_ref[...] = (jnp.dot(x_ref[...], wih_ref[...],
                               preferred_element_type=jnp.float32)
                       + b_ref[...])

        # Initial hidden/cell states are zeros (hidn_st0 / cell_st0 in the module).
        h = jnp.zeros((bp, hp), jnp.float32)
        c = jnp.zeros((bp, hp), jnp.float32)

        # (2) Recurrence: statically unrolled; only (bp,hp)@(hp,4hp) + gate math
        #     sit on the serial critical path.  All slices are tile-aligned.
        for t in range(n):
            r0 = t * bp
            g = gx_ref[r0:r0 + bp, :] + jnp.dot(
                h, whh_ref[...], preferred_element_type=jnp.float32)
            # PyTorch gate order: i, f, g, o.  Each gate occupies its own
            # 128-lane-aligned block [k*hp, (k+1)*hp).
            i_g = jax.nn.sigmoid(g[:, 0 * hp:1 * hp])
            f_g = jax.nn.sigmoid(g[:, 1 * hp:2 * hp])
            g_g = jnp.tanh(g[:, 2 * hp:3 * hp])
            o_g = jax.nn.sigmoid(g[:, 3 * hp:4 * hp])
            c = f_g * c + i_g * g_g
            h = o_g * jnp.tanh(c)
            hall_ref[r0:r0 + bp, :] = h

        # (3) Linear head applied once to all hidden states (epilogue).
        out_ref[...] = (jnp.dot(hall_ref[...], wlin_ref[...],
                                preferred_element_type=jnp.float32)
                        + blin_ref[...]).astype(out_ref.dtype)

    return kernel


@jax.jit
def rnn_lstm_forward(x, w_ih, w_hh, b_ih, b_hh, w_lin, b_lin):
    """x: (n, bs, d); w_ih: (4h, d); w_hh: (4h, h); b_ih/b_hh: (4h,);
    w_lin: (d, h); b_lin: (d,).  Returns objective of shape (n, bs, d)."""
    n, bs, d = x.shape
    h = w_hh.shape[1]
    hp = _round_up(h, 128)   # hidden padded to full 128-lane tiles
    bp = _round_up(bs, 8)    # batch padded to full 8-sublane tiles
    f32 = jnp.float32

    # --- one-time weight plumbing (plain XLA glue): transpose + per-gate lane pad.
    # W_ih^T laid out as (d, 4*hp): gate k occupies lanes [k*hp, k*hp + h).
    wih_p = jnp.transpose(
        jnp.pad(jnp.transpose(w_ih.astype(f32).reshape(4, h, d), (0, 2, 1)),
                ((0, 0), (0, 0), (0, hp - h))),
        (1, 0, 2)).reshape(d, 4 * hp)
    # W_hh^T laid out as (hp, 4*hp); padded rows/cols are zero (inert).
    whh_p = jnp.transpose(
        jnp.pad(jnp.transpose(w_hh.astype(f32).reshape(4, h, h), (0, 2, 1)),
                ((0, 0), (0, hp - h), (0, hp - h))),
        (1, 0, 2)).reshape(hp, 4 * hp)
    # Folded biases (b_ih + b_hh), gate-padded to (1, 4*hp).
    b_p = jnp.pad((b_ih + b_hh).astype(f32).reshape(4, h),
                  ((0, 0), (0, hp - h))).reshape(1, 4 * hp)
    # Linear head: (hp, d) with zero rows for padded hidden lanes.
    wlin_p = jnp.pad(w_lin.astype(f32).T, ((0, hp - h), (0, 0)))
    blin_p = b_lin.astype(f32)[None, :]

    # x: pad batch to bp and flatten (time, batch) so the projection is one matmul.
    x_p = jnp.pad(x.astype(f32), ((0, 0), (0, bp - bs), (0, 0)))
    x2 = x_p.reshape(n * bp, d)

    kernel = _make_lstm_kernel(n, bp, hp)
    vmem_spec = pl.BlockSpec(memory_space=pltpu.MemorySpace.VMEM)

    out_p = pl.pallas_call(
        kernel,
        out_shape=jax.ShapeDtypeStruct((n * bp, d), f32),
        in_specs=[vmem_spec] * 6,
        out_specs=vmem_spec,
        scratch_shapes=[
            pltpu.VMEM((n * bp, 4 * hp), jnp.float32),  # gates_x for all steps
            pltpu.VMEM((n * bp, hp), jnp.float32),      # h_t for all steps (head input)
        ],
    )(x2, wih_p, whh_p, b_p, wlin_p, blin_p)

    # Drop batch padding and restore (n, bs, d).
    return out_p.reshape(n, bp, d)[:, :bs, :]


def rnn_lstm_reference(x, w_ih, w_hh, b_ih, b_hh, w_lin, b_lin):
    """Pure-JAX reference for correctness checking."""
    n, bs, d = x.shape
    h = w_hh.shape[1]

    def step(carry, x_t):
        h_prev, c_prev = carry
        gates = x_t @ w_ih.T + h_prev @ w_hh.T + b_ih + b_hh
        i = jax.nn.sigmoid(gates[:, 0 * h:1 * h])
        f = jax.nn.sigmoid(gates[:, 1 * h:2 * h])
        g = jnp.tanh(gates[:, 2 * h:3 * h])
        o = jax.nn.sigmoid(gates[:, 3 * h:4 * h])
        c_new = f * c_prev + i * g
        h_new = o * jnp.tanh(c_new)
        return (h_new, c_new), h_new

    h0 = jnp.zeros((bs, h), jnp.float32)
    c0 = jnp.zeros((bs, h), jnp.float32)
    _, hs = jax.lax.scan(step, (h0, c0), x)          # (n, bs, h)
    return hs @ w_lin.T + b_lin                       # (n, bs, d)


if __name__ == "__main__":
    # Small shapes consistent with the module: n=seq, bs=batch, d=features, h=hidden.
    n, bs, d, h = 8, 4, 32, 32

    key = jax.random.PRNGKey(0)
    ks = jax.random.split(key, 8)
    bound = 1.0 / jnp.sqrt(h)

    # Deterministic parameter init (PyTorch-style uniform(-1/sqrt(h), 1/sqrt(h))).
    w_ih = jax.random.uniform(ks[0], (4 * h, d), jnp.float32, -bound, bound)
    w_hh = jax.random.uniform(ks[1], (4 * h, h), jnp.float32, -bound, bound)
    b_ih = jax.random.uniform(ks[2], (4 * h,), jnp.float32, -bound, bound)
    b_hh = jax.random.uniform(ks[3], (4 * h,), jnp.float32, -bound, bound)
    w_lin = jax.random.uniform(ks[4], (d, h), jnp.float32, -bound, bound)
    b_lin = jax.random.uniform(ks[5], (d,), jnp.float32, -bound, bound)

    x = jax.random.normal(ks[6], (n, bs, d), jnp.float32)
    target = jax.random.normal(ks[7], (n, bs, d), jnp.float32)

    objective = rnn_lstm_forward(x, w_ih, w_hh, b_ih, b_hh, w_lin, b_lin)
    objective = jax.block_until_ready(objective)

    # MSE loss (mean reduction), as in the module's forward — plain-JAX glue.
    loss = jnp.mean((objective - target) ** 2)
    loss = jax.block_until_ready(loss)

    # Verify against pure-JAX reference.
    ref = rnn_lstm_reference(x, w_ih, w_hh, b_ih, b_hh, w_lin, b_lin)
    assert objective.shape == (n, bs, d)
    assert jnp.allclose(objective, ref, atol=1e-5, rtol=1e-5)

    print("KERNEL_OK")
</pallas_src>

<mosaic_0001>
module attributes {stable_mosaic.version = 11 : i64} {
  func.func @kernel(%arg0: memref<64x32xf32, #tpu.memory_space<vmem>>, %arg1: memref<32x512xf32, #tpu.memory_space<vmem>>, %arg2: memref<128x512xf32, #tpu.memory_space<vmem>>, %arg3: memref<1x512xf32, #tpu.memory_space<vmem>>, %arg4: memref<128x32xf32, #tpu.memory_space<vmem>>, %arg5: memref<1x32xf32, #tpu.memory_space<vmem>>, %arg6: memref<64x32xf32, #tpu.memory_space<vmem>>, %arg7: memref<64x512xf32, #tpu.memory_space<vmem>>, %arg8: memref<64x128xf32, #tpu.memory_space<vmem>>) attributes {dimension_semantics = [], scalar_prefetch = 0 : i64, scratch_operands = 2 : i64, tpu.core_type = #tpu.core_type<tc>} {
    %c0 = arith.constant 0 : index
    %c0_0 = arith.constant 0 : index
    %0 = vector.load %arg0[%c0, %c0_0] : memref<64x32xf32, #tpu.memory_space<vmem>>, vector<64x32xf32>
    %c0_1 = arith.constant 0 : index
    %c0_2 = arith.constant 0 : index
    %1 = vector.load %arg1[%c0_1, %c0_2] : memref<32x512xf32, #tpu.memory_space<vmem>>, vector<32x512xf32>
    %cst = arith.constant dense<0.000000e+00> : vector<64x512xf32>
    %2 = tpu.matmul %0, %1, %cst {dimension_numbers = #tpu.dot_dimension_numbers<[1], [0], [0], [1], [0, 0, 1, 1], [], []>} : vector<64x32xf32>, vector<32x512xf32>, vector<64x512xf32> -> vector<64x512xf32>
    %c0_3 = arith.constant 0 : index
    %c0_4 = arith.constant 0 : index
    %3 = vector.load %arg3[%c0_3, %c0_4] : memref<1x512xf32, #tpu.memory_space<vmem>>, vector<1x512xf32>
    %4 = vector.broadcast %3 : vector<1x512xf32> to vector<64x512xf32>
    %5 = arith.addf %2, %4 : vector<64x512xf32>
    %c0_5 = arith.constant 0 : index
    %c0_6 = arith.constant 0 : index
    %6 = vector.load %arg7[%c0_5, %c0_6] : memref<64x512xf32, #tpu.memory_space<vmem>>, vector<64x512xf32>
    tpu.vector_store %arg7[%c0_5, %c0_6], %5 {strides = array<i32>} : memref<64x512xf32, #tpu.memory_space<vmem>>, vector<64x512xf32>,
    %cst_7 = arith.constant 0.000000e+00 : f32
    %7 = vector.broadcast %cst_7 : f32 to vector<8x128xf32>
    %cst_8 = arith.constant 0.000000e+00 : f32
    %8 = vector.broadcast %cst_8 : f32 to vector<8x128xf32>
    %c0_9 = arith.constant 0 : index
    %c0_10 = arith.constant 0 : index
    %9 = vector.load %arg7[%c0_9, %c0_10] : memref<64x512xf32, #tpu.memory_space<vmem>>, vector<8x512xf32>
    %c0_11 = arith.constant 0 : index
    %c0_12 = arith.constant 0 : index
    %10 = vector.load %arg2[%c0_11, %c0_12] : memref<128x512xf32, #tpu.memory_space<vmem>>, vector<128x512xf32>
    %cst_13 = arith.constant dense<0.000000e+00> : vector<8x512xf32>
    %11 = tpu.matmul %7, %10, %cst_13 {dimension_numbers = #tpu.dot_dimension_numbers<[1], [0], [0], [1], [0, 0, 1, 1], [], []>} : vector<8x128xf32>, vector<128x512xf32>, vector<8x512xf32> -> vector<8x512xf32>
    %12 = arith.addf %9, %11 : vector<8x512xf32>
    %13 = vector.extract_strided_slice %12 {offsets = [0, 0], sizes = [8, 128], strides = [1, 1]} : vector<8x512xf32> to vector<8x128xf32>
    %14 = arith.negf %13 : vector<8x128xf32>
    %15 = math.exp %14 : vector<8x128xf32>
    %cst_14 = arith.constant 1.000000e+00 : f32
    %16 = vector.broadcast %cst_14 : f32 to vector<8x128xf32>
    %17 = arith.addf %16, %15 : vector<8x128xf32>
    %18 = arith.divf %16, %17 : vector<8x128xf32>
    %19 = vector.extract_strided_slice %12 {offsets = [0, 128], sizes = [8, 128], strides = [1, 1]} : vector<8x512xf32> to vector<8x128xf32>
    %20 = arith.negf %19 : vector<8x128xf32>
    %21 = math.exp %20 : vector<8x128xf32>
    %cst_15 = arith.constant 1.000000e+00 : f32
    %22 = vector.broadcast %cst_15 : f32 to vector<8x128xf32>
    %23 = arith.addf %22, %21 : vector<8x128xf32>
    %24 = arith.divf %22, %23 : vector<8x128xf32>
    %25 = vector.extract_strided_slice %12 {offsets = [0, 256], sizes = [8, 128], strides = [1, 1]} : vector<8x512xf32> to vector<8x128xf32>
    %26 = math.tanh %25 : vector<8x128xf32>
    %27 = vector.extract_strided_slice %12 {offsets = [0, 384], sizes = [8, 128], strides = [1, 1]} : vector<8x512xf32> to vector<8x128xf32>
    %28 = arith.negf %27 : vector<8x128xf32>
    %29 = math.exp %28 : vector<8x128xf32>
    %cst_16 = arith.constant 1.000000e+00 : f32
    %30 = vector.broadcast %cst_16 : f32 to vector<8x128xf32>
    %31 = arith.addf %30, %29 : vector<8x128xf32>
    %32 = arith.divf %30, %31 : vector<8x128xf32>
    %33 = arith.mulf %24, %8 : vector<8x128xf32>
    %34 = arith.mulf %18, %26 : vector<8x128xf32>
    %35 = arith.addf %33, %34 : vector<8x128xf32>
    %36 = math.tanh %35 : vector<8x128xf32>
    %37 = arith.mulf %32, %36 : vector<8x128xf32>
    %c0_17 = arith.constant 0 : index
    %c0_18 = arith.constant 0 : index
    %38 = vector.load %arg8[%c0_17, %c0_18] : memref<64x128xf32, #tpu.memory_space<vmem>>, vector<8x128xf32>
    tpu.vector_store %arg8[%c0_17, %c0_18], %37 {strides = array<i32>} : memref<64x128xf32, #tpu.memory_space<vmem>>, vector<8x128xf32>,
    %c8 = arith.constant 8 : index
    %c0_19 = arith.constant 0 : index
    %39 = vector.load %arg7[%c8, %c0_19] : memref<64x512xf32, #tpu.memory_space<vmem>>, vector<8x512xf32>
    %c0_20 = arith.constant 0 : index
    %c0_21 = arith.constant 0 : index
    %40 = vector.load %arg2[%c0_20, %c0_21] : memref<128x512xf32, #tpu.memory_space<vmem>>, vector<128x512xf32>
    %cst_22 = arith.constant dense<0.000000e+00> : vector<8x512xf32>
    %41 = tpu.matmul %37, %40, %cst_22 {dimension_numbers = #tpu.dot_dimension_numbers<[1], [0], [0], [1], [0, 0, 1, 1], [], []>} : vector<8x128xf32>, vector<128x512xf32>, vector<8x512xf32> -> vector<8x512xf32>
    %42 = arith.addf %39, %41 : vector<8x512xf32>
    %43 = vector.extract_strided_slice %42 {offsets = [0, 0], sizes = [8, 128], strides = [1, 1]} : vector<8x512xf32> to vector<8x128xf32>
    %44 = arith.negf %43 : vector<8x128xf32>
    %45 = math.exp %44 : vector<8x128xf32>
    %cst_23 = arith.constant 1.000000e+00 : f32
    %46 = vector.broadcast %cst_23 : f32 to vector<8x128xf32>
    %47 = arith.addf %46, %45 : vector<8x128xf32>
    %48 = arith.divf %46, %47 : vector<8x128xf32>
    %49 = vector.extract_strided_slice %42 {offsets = [0, 128], sizes = [8, 128], strides = [1, 1]} : vector<8x512xf32> to vector<8x128xf32>
    %50 = arith.negf %49 : vector<8x128xf32>
    %51 = math.exp %50 : vector<8x128xf32>
    %cst_24 = arith.constant 1.000000e+00 : f32
    %52 = vector.broadcast %cst_24 : f32 to vector<8x128xf32>
    %53 = arith.addf %52, %51 : vector<8x128xf32>
    %54 = arith.divf %52, %53 : vector<8x128xf32>
    %55 = vector.extract_strided_slice %42 {offsets = [0, 256], sizes = [8, 128], strides = [1, 1]} : vector<8x512xf32> to vector<8x128xf32>
    %56 = math.tanh %55 : vector<8x128xf32>
    %57 = vector.extract_strided_slice %42 {offsets = [0, 384], sizes = [8, 128], strides = [1, 1]} : vector<8x512xf32> to vector<8x128xf32>
    %58 = arith.negf %57 : vector<8x128xf32>
    %59 = math.exp %58 : vector<8x128xf32>
    %cst_25 = arith.constant 1.000000e+00 : f32
    %60 = vector.broadcast %cst_25 : f32 to vector<8x128xf32>
    %61 = arith.addf %60, %59 : vector<8x128xf32>
    %62 = arith.divf %60, %61 : vector<8x128xf32>
    %63 = arith.mulf %54, %35 : vector<8x128xf32>
    %64 = arith.mulf %48, %56 : vector<8x128xf32>
    %65 = arith.addf %63, %64 : vector<8x128xf32>
    %66 = math.tanh %65 : vector<8x128xf32>
    %67 = arith.mulf %62, %66 : vector<8x128xf32>
    %c8_26 = arith.constant 8 : index
    %c0_27 = arith.constant 0 : index
    %68 = vector.load %arg8[%c8_26, %c0_27] : memref<64x128xf32, #tpu.memory_space<vmem>>, vector<8x128xf32>
    tpu.vector_store %arg8[%c8_26, %c0_27], %67 {strides = array<i32>} : memref<64x128xf32, #tpu.memory_space<vmem>>, vector<8x128xf32>,
    %c16 = arith.constant 16 : index
    %c0_28 = arith.constant 0 : index
    %69 = vector.load %arg7[%c16, %c0_28] : memref<64x512xf32, #tpu.memory_space<vmem>>, vector<8x512xf32>
    %c0_29 = arith.constant 0 : index
    %c0_30 = arith.constant 0 : index
    %70 = vector.load %arg2[%c0_29, %c0_30] : memref<128x512xf32, #tpu.memory_space<vmem>>, vector<128x512xf32>
    %cst_31 = arith.constant dense<0.000000e+00> : vector<8x512xf32>
    %71 = tpu.matmul %67, %70, %cst_31 {dimension_numbers = #tpu.dot_dimension_numbers<[1], [0], [0], [1], [0, 0, 1, 1], [], []>} : vector<8x128xf32>, vector<128x512xf32>, vector<8x512xf32> -> vector<8x512xf32>
    %72 = arith.addf %69, %71 : vector<8x512xf32>
    %73 = vector.extract_strided_slice %72 {offsets = [0, 0], sizes = [8, 128], strides = [1, 1]} : vector<8x512xf32> to vector<8x128xf32>
    %74 = arith.negf %73 : vector<8x128xf32>
    %75 = math.exp %74 : vector<8x128xf32>
    %cst_32 = arith.constant 1.000000e+00 : f32
    %76 = vector.broadcast %cst_32 : f32 to vector<8x128xf32>
    %77 = arith.addf %76, %75 : vector<8x128xf32>
    %78 = arith.divf %76, %77 : vector<8x128xf32>
    %79 = vector.extract_strided_slice %72 {offsets = [0, 128], sizes = [8, 128], strides = [1, 1]} : vector<8x512xf32> to vector<8x128xf32>
    %80 = arith.negf %79 : vector<8x128xf32>
    %81 = math.exp %80 : vector<8x128xf32>
    %cst_33 = arith.constant 1.000000e+00 : f32
    %82 = vector.broadcast %cst_33 : f32 to vector<8x128xf32>
    %83 = arith.addf %82, %81 : vector<8x128xf32>
    %84 = arith.divf %82, %83 : vector<8x128xf32>
    %85 = vector.extract_strided_slice %72 {offsets = [0, 256], sizes = [8, 128], strides = [1, 1]} : vector<8x512xf32> to vector<8x128xf32>
    %86 = math.tanh %85 : vector<8x128xf32>
    %87 = vector.extract_strided_slice %72 {offsets = [0, 384], sizes = [8, 128], strides = [1, 1]} : vector<8x512xf32> to vector<8x128xf32>
    %88 = arith.negf %87 : vector<8x128xf32>
    %89 = math.exp %88 : vector<8x128xf32>
    %cst_34 = arith.constant 1.000000e+00 : f32
    %90 = vector.broadcast %cst_34 : f32 to vector<8x128xf32>
    %91 = arith.addf %90, %89 : vector<8x128xf32>
    %92 = arith.divf %90, %91 : vector<8x128xf32>
    %93 = arith.mulf %84, %65 : vector<8x128xf32>
    %94 = arith.mulf %78, %86 : vector<8x128xf32>
    %95 = arith.addf %93, %94 : vector<8x128xf32>
    %96 = math.tanh %95 : vector<8x128xf32>
    %97 = arith.mulf %92, %96 : vector<8x128xf32>
    %c16_35 = arith.constant 16 : index
    %c0_36 = arith.constant 0 : index
    %98 = vector.load %arg8[%c16_35, %c0_36] : memref<64x128xf32, #tpu.memory_space<vmem>>, vector<8x128xf32>
    tpu.vector_store %arg8[%c16_35, %c0_36], %97 {strides = array<i32>} : memref<64x128xf32, #tpu.memory_space<vmem>>, vector<8x128xf32>,
    %c24 = arith.constant 24 : index
    %c0_37 = arith.constant 0 : index
    %99 = vector.load %arg7[%c24, %c0_37] : memref<64x512xf32, #tpu.memory_space<vmem>>, vector<8x512xf32>
    %c0_38 = arith.constant 0 : index
    %c0_39 = arith.constant 0 : index
    %100 = vector.load %arg2[%c0_38, %c0_39] : memref<128x512xf32, #tpu.memory_space<vmem>>, vector<128x512xf32>
    %cst_40 = arith.constant dense<0.000000e+00> : vector<8x512xf32>
    %101 = tpu.matmul %97, %100, %cst_40 {dimension_numbers = #tpu.dot_dimension_numbers<[1], [0], [0], [1], [0, 0, 1, 1], [], []>} : vector<8x128xf32>, vector<128x512xf32>, vector<8x512xf32> -> vector<8x512xf32>
    %102 = arith.addf %99, %101 : vector<8x512xf32>
    %103 = vector.extract_strided_slice %102 {offsets = [0, 0], sizes = [8, 128], strides = [1, 1]} : vector<8x512xf32> to vector<8x128xf32>
    %104 = arith.negf %103 : vector<8x128xf32>
    %105 = math.exp %104 : vector<8x128xf32>
    %cst_41 = arith.constant 1.000000e+00 : f32
    %106 = vector.broadcast %cst_41 : f32 to vector<8x128xf32>
    %107 = arith.addf %106, %105 : vector<8x128xf32>
    %108 = arith.divf %106, %107 : vector<8x128xf32>
    %109 = vector.extract_strided_slice %102 {offsets = [0, 128], sizes = [8, 128], strides = [1, 1]} : vector<8x512xf32> to vector<8x128xf32>
    %110 = arith.negf %109 : vector<8x128xf32>
    %111 = math.exp %110 : vector<8x128xf32>
    %cst_42 = arith.constant 1.000000e+00 : f32
    %112 = vector.broadcast %cst_42 : f32 to vector<8x128xf32>
    %113 = arith.addf %112, %111 : vector<8x128xf32>
    %114 = arith.divf %112, %113 : vector<8x128xf32>
    %115 = vector.extract_strided_slice %102 {offsets = [0, 256], sizes = [8, 128], strides = [1, 1]} : vector<8x512xf32> to vector<8x128xf32>
    %116 = math.tanh %115 : vector<8x128xf32>
    %117 = vector.extract_strided_slice %102 {offsets = [0, 384], sizes = [8, 128], strides = [1, 1]} : vector<8x512xf32> to vector<8x128xf32>
    %118 = arith.negf %117 : vector<8x128xf32>
    %119 = math.exp %118 : vector<8x128xf32>
    %cst_43 = arith.constant 1.000000e+00 : f32
    %120 = vector.broadcast %cst_43 : f32 to vector<8x128xf32>
    %121 = arith.addf %120, %119 : vector<8x128xf32>
    %122 = arith.divf %120, %121 : vector<8x128xf32>
    %123 = arith.mulf %114, %95 : vector<8x128xf32>
    %124 = arith.mulf %108, %116 : vector<8x128xf32>
    %125 = arith.addf %123, %124 : vector<8x128xf32>
    %126 = math.tanh %125 : vector<8x128xf32>
    %127 = arith.mulf %122, %126 : vector<8x128xf32>
    %c24_44 = arith.constant 24 : index
    %c0_45 = arith.constant 0 : index
    %128 = vector.load %arg8[%c24_44, %c0_45] : memref<64x128xf32, #tpu.memory_space<vmem>>, vector<8x128xf32>
    tpu.vector_store %arg8[%c24_44, %c0_45], %127 {strides = array<i32>} : memref<64x128xf32, #tpu.memory_space<vmem>>, vector<8x128xf32>,
    %c32 = arith.constant 32 : index
    %c0_46 = arith.constant 0 : index
    %129 = vector.load %arg7[%c32, %c0_46] : memref<64x512xf32, #tpu.memory_space<vmem>>, vector<8x512xf32>
    %c0_47 = arith.constant 0 : index
    %c0_48 = arith.constant 0 : index
    %130 = vector.load %arg2[%c0_47, %c0_48] : memref<128x512xf32, #tpu.memory_space<vmem>>, vector<128x512xf32>
    %cst_49 = arith.constant dense<0.000000e+00> : vector<8x512xf32>
    %131 = tpu.matmul %127, %130, %cst_49 {dimension_numbers = #tpu.dot_dimension_numbers<[1], [0], [0], [1], [0, 0, 1, 1], [], []>} : vector<8x128xf32>, vector<128x512xf32>, vector<8x512xf32> -> vector<8x512xf32>
    %132 = arith.addf %129, %131 : vector<8x512xf32>
    %133 = vector.extract_strided_slice %132 {offsets = [0, 0], sizes = [8, 128], strides = [1, 1]} : vector<8x512xf32> to vector<8x128xf32>
    %134 = arith.negf %133 : vector<8x128xf32>
    %135 = math.exp %134 : vector<8x128xf32>
    %cst_50 = arith.constant 1.000000e+00 : f32
    %136 = vector.broadcast %cst_50 : f32 to vector<8x128xf32>
    %137 = arith.addf %136, %135 : vector<8x128xf32>
    %138 = arith.divf %136, %137 : vector<8x128xf32>
    %139 = vector.extract_strided_slice %132 {offsets = [0, 128], sizes = [8, 128], strides = [1, 1]} : vector<8x512xf32> to vector<8x128xf32>
    %140 = arith.negf %139 : vector<8x128xf32>
    %141 = math.exp %140 : vector<8x128xf32>
    %cst_51 = arith.constant 1.000000e+00 : f32
    %142 = vector.broadcast %cst_51 : f32 to vector<8x128xf32>
    %143 = arith.addf %142, %141 : vector<8x128xf32>
    %144 = arith.divf %142, %143 : vector<8x128xf32>
    %145 = vector.extract_strided_slice %132 {offsets = [0, 256], sizes = [8, 128], strides = [1, 1]} : vector<8x512xf32> to vector<8x128xf32>
    %146 = math.tanh %145 : vector<8x128xf32>
    %147 = vector.extract_strided_slice %132 {offsets = [0, 384], sizes = [8, 128], strides = [1, 1]} : vector<8x512xf32> to vector<8x128xf32>
    %148 = arith.negf %147 : vector<8x128xf32>
    %149 = math.exp %148 : vector<8x128xf32>
    %cst_52 = arith.constant 1.000000e+00 : f32
    %150 = vector.broadcast %cst_52 : f32 to vector<8x128xf32>
    %151 = arith.addf %150, %149 : vector<8x128xf32>
    %152 = arith.divf %150, %151 : vector<8x128xf32>
    %153 = arith.mulf %144, %125 : vector<8x128xf32>
    %154 = arith.mulf %138, %146 : vector<8x128xf32>
    %155 = arith.addf %153, %154 : vector<8x128xf32>
    %156 = math.tanh %155 : vector<8x128xf32>
    %157 = arith.mulf %152, %156 : vector<8x128xf32>
    %c32_53 = arith.constant 32 : index
    %c0_54 = arith.constant 0 : index
    %158 = vector.load %arg8[%c32_53, %c0_54] : memref<64x128xf32, #tpu.memory_space<vmem>>, vector<8x128xf32>
    tpu.vector_store %arg8[%c32_53, %c0_54], %157 {strides = array<i32>} : memref<64x128xf32, #tpu.memory_space<vmem>>, vector<8x128xf32>,
    %c40 = arith.constant 40 : index
    %c0_55 = arith.constant 0 : index
    %159 = vector.load %arg7[%c40, %c0_55] : memref<64x512xf32, #tpu.memory_space<vmem>>, vector<8x512xf32>
    %c0_56 = arith.constant 0 : index
    %c0_57 = arith.constant 0 : index
    %160 = vector.load %arg2[%c0_56, %c0_57] : memref<128x512xf32, #tpu.memory_space<vmem>>, vector<128x512xf32>
    %cst_58 = arith.constant dense<0.000000e+00> : vector<8x512xf32>
    %161 = tpu.matmul %157, %160, %cst_58 {dimension_numbers = #tpu.dot_dimension_numbers<[1], [0], [0], [1], [0, 0, 1, 1], [], []>} : vector<8x128xf32>, vector<128x512xf32>, vector<8x512xf32> -> vector<8x512xf32>
    %162 = arith.addf %159, %161 : vector<8x512xf32>
    %163 = vector.extract_strided_slice %162 {offsets = [0, 0], sizes = [8, 128], strides = [1, 1]} : vector<8x512xf32> to vector<8x128xf32>
    %164 = arith.negf %163 : vector<8x128xf32>
    %165 = math.exp %164 : vector<8x128xf32>
    %cst_59 = arith.constant 1.000000e+00 : f32
    %166 = vector.broadcast %cst_59 : f32 to vector<8x128xf32>
    %167 = arith.addf %166, %165 : vector<8x128xf32>
    %168 = arith.divf %166, %167 : vector<8x128xf32>
    %169 = vector.extract_strided_slice %162 {offsets = [0, 128], sizes = [8, 128], strides = [1, 1]} : vector<8x512xf32> to vector<8x128xf32>
    %170 = arith.negf %169 : vector<8x128xf32>
    %171 = math.exp %170 : vector<8x128xf32>
    %cst_60 = arith.constant 1.000000e+00 : f32
    %172 = vector.broadcast %cst_60 : f32 to vector<8x128xf32>
    %173 = arith.addf %172, %171 : vector<8x128xf32>
    %174 = arith.divf %172, %173 : vector<8x128xf32>
    %175 = vector.extract_strided_slice %162 {offsets = [0, 256], sizes = [8, 128], strides = [1, 1]} : vector<8x512xf32> to vector<8x128xf32>
    %176 = math.tanh %175 : vector<8x128xf32>
    %177 = vector.extract_strided_slice %162 {offsets = [0, 384], sizes = [8, 128], strides = [1, 1]} : vector<8x512xf32> to vector<8x128xf32>
    %178 = arith.negf %177 : vector<8x128xf32>
    %179 = math.exp %178 : vector<8x128xf32>
    %cst_61 = arith.constant 1.000000e+00 : f32
    %180 = vector.broadcast %cst_61 : f32 to vector<8x128xf32>
    %181 = arith.addf %180, %179 : vector<8x128xf32>
    %182 = arith.divf %180, %181 : vector<8x128xf32>
    %183 = arith.mulf %174, %155 : vector<8x128xf32>
    %184 = arith.mulf %168, %176 : vector<8x128xf32>
    %185 = arith.addf %183, %184 : vector<8x128xf32>
    %186 = math.tanh %185 : vector<8x128xf32>
    %187 = arith.mulf %182, %186 : vector<8x128xf32>
    %c40_62 = arith.constant 40 : index
    %c0_63 = arith.constant 0 : index
    %188 = vector.load %arg8[%c40_62, %c0_63] : memref<64x128xf32, #tpu.memory_space<vmem>>, vector<8x128xf32>
    tpu.vector_store %arg8[%c40_62, %c0_63], %187 {strides = array<i32>} : memref<64x128xf32, #tpu.memory_space<vmem>>, vector<8x128xf32>,
    %c48 = arith.constant 48 : index
    %c0_64 = arith.constant 0 : index
    %189 = vector.load %arg7[%c48, %c0_64] : memref<64x512xf32, #tpu.memory_space<vmem>>, vector<8x512xf32>
    %c0_65 = arith.constant 0 : index
    %c0_66 = arith.constant 0 : index
    %190 = vector.load %arg2[%c0_65, %c0_66] : memref<128x512xf32, #tpu.memory_space<vmem>>, vector<128x512xf32>
    %cst_67 = arith.constant dense<0.000000e+00> : vector<8x512xf32>
    %191 = tpu.matmul %187, %190, %cst_67 {dimension_numbers = #tpu.dot_dimension_numbers<[1], [0], [0], [1], [0, 0, 1, 1], [], []>} : vector<8x128xf32>, vector<128x512xf32>, vector<8x512xf32> -> vector<8x512xf32>
    %192 = arith.addf %189, %191 : vector<8x512xf32>
    %193 = vector.extract_strided_slice %192 {offsets = [0, 0], sizes = [8, 128], strides = [1, 1]} : vector<8x512xf32> to vector<8x128xf32>
    %194 = arith.negf %193 : vector<8x128xf32>
    %195 = math.exp %194 : vector<8x128xf32>
    %cst_68 = arith.constant 1.000000e+00 : f32
    %196 = vector.broadcast %cst_68 : f32 to vector<8x128xf32>
    %197 = arith.addf %196, %195 : vector<8x128xf32>
    %198 = arith.divf %196, %197 : vector<8x128xf32>
    %199 = vector.extract_strided_slice %192 {offsets = [0, 128], sizes = [8, 128], strides = [1, 1]} : vector<8x512xf32> to vector<8x128xf32>
    %200 = arith.negf %199 : vector<8x128xf32>
    %201 = math.exp %200 : vector<8x128xf32>
    %cst_69 = arith.constant 1.000000e+00 : f32
    %202 = vector.broadcast %cst_69 : f32 to vector<8x128xf32>
    %203 = arith.addf %202, %201 : vector<8x128xf32>
    %204 = arith.divf %202, %203 : vector<8x128xf32>
    %205 = vector.extract_strided_slice %192 {offsets = [0, 256], sizes = [8, 128], strides = [1, 1]} : vector<8x512xf32> to vector<8x128xf32>
    %206 = math.tanh %205 : vector<8x128xf32>
    %207 = vector.extract_strided_slice %192 {offsets = [0, 384], sizes = [8, 128], strides = [1, 1]} : vector<8x512xf32> to vector<8x128xf32>
    %208 = arith.negf %207 : vector<8x128xf32>
    %209 = math.exp %208 : vector<8x128xf32>
    %cst_70 = arith.constant 1.000000e+00 : f32
    %210 = vector.broadcast %cst_70 : f32 to vector<8x128xf32>
    %211 = arith.addf %210, %209 : vector<8x128xf32>
    %212 = arith.divf %210, %211 : vector<8x128xf32>
    %213 = arith.mulf %204, %185 : vector<8x128xf32>
    %214 = arith.mulf %198, %206 : vector<8x128xf32>
    %215 = arith.addf %213, %214 : vector<8x128xf32>
    %216 = math.tanh %215 : vector<8x128xf32>
    %217 = arith.mulf %212, %216 : vector<8x128xf32>
    %c48_71 = arith.constant 48 : index
    %c0_72 = arith.constant 0 : index
    %218 = vector.load %arg8[%c48_71, %c0_72] : memref<64x128xf32, #tpu.memory_space<vmem>>, vector<8x128xf32>
    tpu.vector_store %arg8[%c48_71, %c0_72], %217 {strides = array<i32>} : memref<64x128xf32, #tpu.memory_space<vmem>>, vector<8x128xf32>,
    %c56 = arith.constant 56 : index
    %c0_73 = arith.constant 0 : index
    %219 = vector.load %arg7[%c56, %c0_73] : memref<64x512xf32, #tpu.memory_space<vmem>>, vector<8x512xf32>
    %c0_74 = arith.constant 0 : index
    %c0_75 = arith.constant 0 : index
    %220 = vector.load %arg2[%c0_74, %c0_75] : memref<128x512xf32, #tpu.memory_space<vmem>>, vector<128x512xf32>
    %cst_76 = arith.constant dense<0.000000e+00> : vector<8x512xf32>
    %221 = tpu.matmul %217, %220, %cst_76 {dimension_numbers = #tpu.dot_dimension_numbers<[1], [0], [0], [1], [0, 0, 1, 1], [], []>} : vector<8x128xf32>, vector<128x512xf32>, vector<8x512xf32> -> vector<8x512xf32>
    %222 = arith.addf %219, %221 : vector<8x512xf32>
    %223 = vector.extract_strided_slice %222 {offsets = [0, 0], sizes = [8, 128], strides = [1, 1]} : vector<8x512xf32> to vector<8x128xf32>
    %224 = arith.negf %223 : vector<8x128xf32>
    %225 = math.exp %224 : vector<8x128xf32>
    %cst_77 = arith.constant 1.000000e+00 : f32
    %226 = vector.broadcast %cst_77 : f32 to vector<8x128xf32>
    %227 = arith.addf %226, %225 : vector<8x128xf32>
    %228 = arith.divf %226, %227 : vector<8x128xf32>
    %229 = vector.extract_strided_slice %222 {offsets = [0, 128], sizes = [8, 128], strides = [1, 1]} : vector<8x512xf32> to vector<8x128xf32>
    %230 = arith.negf %229 : vector<8x128xf32>
    %231 = math.exp %230 : vector<8x128xf32>
    %cst_78 = arith.constant 1.000000e+00 : f32
    %232 = vector.broadcast %cst_78 : f32 to vector<8x128xf32>
    %233 = arith.addf %232, %231 : vector<8x128xf32>
    %234 = arith.divf %232, %233 : vector<8x128xf32>
    %235 = vector.extract_strided_slice %222 {offsets = [0, 256], sizes = [8, 128], strides = [1, 1]} : vector<8x512xf32> to vector<8x128xf32>
    %236 = math.tanh %235 : vector<8x128xf32>
    %237 = vector.extract_strided_slice %222 {offsets = [0, 384], sizes = [8, 128], strides = [1, 1]} : vector<8x512xf32> to vector<8x128xf32>
    %238 = arith.negf %237 : vector<8x128xf32>
    %239 = math.exp %238 : vector<8x128xf32>
    %cst_79 = arith.constant 1.000000e+00 : f32
    %240 = vector.broadcast %cst_79 : f32 to vector<8x128xf32>
    %241 = arith.addf %240, %239 : vector<8x128xf32>
    %242 = arith.divf %240, %241 : vector<8x128xf32>
    %243 = arith.mulf %234, %215 : vector<8x128xf32>
    %244 = arith.mulf %228, %236 : vector<8x128xf32>
    %245 = arith.addf %243, %244 : vector<8x128xf32>
    %246 = math.tanh %245 : vector<8x128xf32>
    %247 = arith.mulf %242, %246 : vector<8x128xf32>
    %c56_80 = arith.constant 56 : index
    %c0_81 = arith.constant 0 : index
    %248 = vector.load %arg8[%c56_80, %c0_81] : memref<64x128xf32, #tpu.memory_space<vmem>>, vector<8x128xf32>
    tpu.vector_store %arg8[%c56_80, %c0_81], %247 {strides = array<i32>} : memref<64x128xf32, #tpu.memory_space<vmem>>, vector<8x128xf32>,
    %c0_82 = arith.constant 0 : index
    %c0_83 = arith.constant 0 : index
    %249 = vector.load %arg8[%c0_82, %c0_83] : memref<64x128xf32, #tpu.memory_space<vmem>>, vector<64x128xf32>
    %c0_84 = arith.constant 0 : index
    %c0_85 = arith.constant 0 : index
    %250 = vector.load %arg4[%c0_84, %c0_85] : memref<128x32xf32, #tpu.memory_space<vmem>>, vector<128x32xf32>
    %cst_86 = arith.constant dense<0.000000e+00> : vector<64x32xf32>
    %251 = tpu.matmul %249, %250, %cst_86 {dimension_numbers = #tpu.dot_dimension_numbers<[1], [0], [0], [1], [0, 0, 1, 1], [], []>} : vector<64x128xf32>, vector<128x32xf32>, vector<64x32xf32> -> vector<64x32xf32>
    %c0_87 = arith.constant 0 : index
    %c0_88 = arith.constant 0 : index
    %252 = vector.load %arg5[%c0_87, %c0_88] : memref<1x32xf32, #tpu.memory_space<vmem>>, vector<1x32xf32>
    %253 = vector.broadcast %252 : vector<1x32xf32> to vector<64x32xf32>
    %254 = arith.addf %251, %253 : vector<64x32xf32>
    %c0_89 = arith.constant 0 : index
    %c0_90 = arith.constant 0 : index
    %255 = vector.load %arg6[%c0_89, %c0_90] : memref<64x32xf32, #tpu.memory_space<vmem>>, vector<64x32xf32>
    tpu.vector_store %arg6[%c0_89, %c0_90], %254 {strides = array<i32>} : memref<64x32xf32, #tpu.memory_space<vmem>>, vector<64x32xf32>,
    return
  }
}

</mosaic_0001>

<llo_original>
// kernel: rnn_lstm_forward.1
$region0: #{rnn_lstm_forward.1}
  #allocation0 [shape = 'u32[]', space=smem, size = 0x4, offset = 0x4, fixed_abs, tag = 'smem constant byte address 0x4 - core index']
  #allocation1 [shape = 'u32[144,128]{1,0:T(1,128)}', space=vmem, size = 0x12000, scoped, tag = 'internal scratch']
  #allocation2 [shape = 'f32[64,512]{1,0:T(8,128)}', space=vmem, size = 0x20000, scoped, tag = 'scratch operand']
  #allocation3 [shape = 'f32[64,128]{1,0:T(8,128)}', space=vmem, size = 0x8000, scoped, tag = 'scratch operand']
  %s0 = inlined_call_operand.vmem [shape: f32[64,32], index: 0, kind: input, shape index: {}]
  %s1 = inlined_call_operand.vmem [shape: f32[32,512], index: 1, kind: input, shape index: {}]
  %s2 = inlined_call_operand.vmem [shape: f32[128,512], index: 2, kind: input, shape index: {}]
  %s3 = inlined_call_operand.vmem [shape: f32[1,512], index: 3, kind: input, shape index: {}]
  %s4 = inlined_call_operand.vmem [shape: f32[128,32], index: 4, kind: input, shape index: {}]
  %s5 = inlined_call_operand.vmem [shape: f32[1,32], index: 5, kind: input, shape index: {}]
  %s6 = inlined_call_operand.vmem [shape: f32[64,32], index: 6, kind: output, shape index: {}]
  %s7 = sld [smem:[#allocation0]]
  $region34: #{rnn_lstm_forward.1} parent=0
    _
  %s9 = ssub.s32 1, %s7
  %s10 = scalar_select 0, %s9, %s7
  // Predicated region
  $region2: #{rnn_lstm_forward.1} parent=0 // pred_check
    _
  $region3: #{rnn_lstm_forward.1} parent=0 // pred_check_branch
    %12 = sbr.rel (0) target = $region5
  $region4: #{rnn_lstm_forward.1} parent=0 // pred_region
    _
  $region5: #{rnn_lstm_forward.1} parent=0 // pred_fallthru
    _
  // Predicated region
  $region6: #{rnn_lstm_forward.1} parent=0 // pred_check
    _
  $region7: #{rnn_lstm_forward.1} parent=0 // pred_check_branch
    %14 = sbr.rel (0) target = $region9
  $region8: #{rnn_lstm_forward.1} parent=0 // pred_region
    _
  $region9: #{rnn_lstm_forward.1} parent=0 // pred_fallthru
    _
  // Predicated region
  $region10: #{rnn_lstm_forward.1} parent=0 // pred_check
    _
  $region11: #{rnn_lstm_forward.1} parent=0 // pred_check_branch
    %16 = sbr.rel (0) target = $region13
  $region12: #{rnn_lstm_forward.1} parent=0 // pred_region
    _
  $region13: #{rnn_lstm_forward.1} parent=0 // pred_fallthru
    _
  // Predicated region
  $region14: #{rnn_lstm_forward.1} parent=0 // pred_check
    _
  $region15: #{rnn_lstm_forward.1} parent=0 // pred_check_branch
    %18 = sbr.rel (0) target = $region17
  $region16: #{rnn_lstm_forward.1} parent=0 // pred_region
    _
  $region17: #{rnn_lstm_forward.1} parent=0 // pred_fallthru
    _
  // Predicated region
  $region18: #{rnn_lstm_forward.1} parent=0 // pred_check
    _
  $region19: #{rnn_lstm_forward.1} parent=0 // pred_check_branch
    %20 = sbr.rel (0) target = $region21
  $region20: #{rnn_lstm_forward.1} parent=0 // pred_region
    _
  $region21: #{rnn_lstm_forward.1} parent=0 // pred_fallthru
    _
  // Predicated region
  $region22: #{rnn_lstm_forward.1} parent=0 // pred_check
    _
  $region23: #{rnn_lstm_forward.1} parent=0 // pred_check_branch
    %22 = sbr.rel (0) target = $region25
  $region24: #{rnn_lstm_forward.1} parent=0 // pred_region
    _
  $region25: #{rnn_lstm_forward.1} parent=0 // pred_fallthru
    _
  %v23 = vld [vmem:[%s0] sm:$0xff]
  %v24 = vld [vmem:[%s0 + $0x8] sm:$0xff]
  %v25 = vld [vmem:[%s0 + $0x10] sm:$0xff]
  %v26 = vld [vmem:[%s0 + $0x18] sm:$0xff]
  %v27 = vld [vmem:[%s0 + $0x20] sm:$0xff]
  %v28 = vld [vmem:[%s0 + $0x28] sm:$0xff]
  %v29 = vld [vmem:[%s0 + $0x30] sm:$0xff]
  %v30 = vld [vmem:[%s0 + $0x38] sm:$0xff]
  %v31 = vld [vmem:[%s1] sm:$0xff]
  %v32 = vld [vmem:[%s1 + $0x8] sm:$0xff]
  %v33 = vld [vmem:[%s1 + $0x10] sm:$0xff]
  %v34 = vld [vmem:[%s1 + $0x18] sm:$0xff]
  %v35 = vld [vmem:[%s1 + $0x20] sm:$0xff]
  %v36 = vld [vmem:[%s1 + $0x28] sm:$0xff]
  %v37 = vld [vmem:[%s1 + $0x30] sm:$0xff]
  %v38 = vld [vmem:[%s1 + $0x38] sm:$0xff]
  %v39 = vld [vmem:[%s1 + $0x40] sm:$0xff]
  %v40 = vld [vmem:[%s1 + $0x48] sm:$0xff]
  %v41 = vld [vmem:[%s1 + $0x50] sm:$0xff]
  %v42 = vld [vmem:[%s1 + $0x58] sm:$0xff]
  %v43 = vld [vmem:[%s1 + $0x60] sm:$0xff]
  %v44 = vld [vmem:[%s1 + $0x68] sm:$0xff]
  %v45 = vld [vmem:[%s1 + $0x70] sm:$0xff]
  %v46 = vld [vmem:[%s1 + $0x78] sm:$0xff]
  %v47 = vld [vmem:[%s3] sm:$0xf]
  %v49 = vlaneseq
  %v50 = vshrl.u32 %v49, 7
  %v51 = vsub.s32 0, %v50
  %v52 = vrot.slane %v47, %v51
  %v53 = vlaneseq
  %v54 = vshrl.u32 %v53, 7
  %v55 = vsub.s32 1, %v54
  %v56 = vrot.slane %v47, %v55
  %v57 = vlaneseq
  %v58 = vshrl.u32 %v57, 7
  %v59 = vsub.s32 2, %v58
  %v60 = vrot.slane %v47, %v59
  %v61 = vlaneseq
  %v62 = vshrl.u32 %v61, 7
  %v63 = vsub.s32 3, %v62
  %v64 = vrot.slane %v47, %v63
  %vm69 = vcmask 261120
  %v71 = vsel %vm69, %v23, 0
  %v74 = vsel %vm69, %v24, 0
  %v77 = vsel %vm69, %v25, 0
  %v80 = vsel %vm69, %v26, 0
  %v83 = vsel %vm69, %v27, 0
  %v86 = vsel %vm69, %v28, 0
  %v89 = vsel %vm69, %v29, 0
  %v92 = vsel %vm69, %v30, 0
  %94 = vmatprep.subr.mxu0 %v32
  %95 = vmatpush1.msra.mxu0 %v31
  %96 = vmatprep.subr.mxu0 %v36
  %97 = vmatpush1.msra.mxu0 %v35
  %98 = vmatprep.subr.mxu0 %v40
  %99 = vmatpush1.msra.mxu0 %v39
  %100 = vmatprep.subr.mxu0 %v44
  %101 = vmatpush1.msra.mxu0 %v43
  %102 = vmatprep.subr.mxu0 0.0
  %103 = vmatpush1.msra.mxu0 0.0
  %104 = vmatprep.subr.mxu0 0.0
  %105 = vmatpush1.msra.mxu0 0.0
  %106 = vmatprep.subr.mxu0 0.0
  %107 = vmatpush1.msra.mxu0 0.0
  %108 = vmatprep.subr.mxu0 0.0
  %109 = vmatpush1.msra.mxu0 0.0
  %110 = vmatprep.subr.mxu0 0.0
  %111 = vmatpush1.msra.mxu0 0.0
  %112 = vmatprep.subr.mxu0 0.0
  %113 = vmatpush1.msra.mxu0 0.0
  %114 = vmatprep.subr.mxu0 0.0
  %115 = vmatpush1.msra.mxu0 0.0
  %116 = vmatprep.subr.mxu0 0.0
  %117 = vmatpush1.msra.mxu0 0.0
  %118 = vmatprep.subr.mxu0 0.0
  %119 = vmatpush1.msra.mxu0 0.0
  %120 = vmatprep.subr.mxu0 0.0
  %121 = vmatpush1.msra.mxu0 0.0
  %122 = vmatprep.subr.mxu0 0.0
  %123 = vmatpush1.msra.mxu0 0.0
  %124 = vmatprep.subr.mxu0 0.0
  %125 = vmatpush1.msra.mxu0 0.0
  %126 = vmatprep.subr.mxu0 0.0
  %127 = vmatpush1.msra.mxu0 0.0
  %128 = vmatprep.subr.mxu0 0.0
  %129 = vmatpush1.msra.mxu0 0.0
  %130 = vmatprep.subr.mxu0 0.0
  %131 = vmatpush1.msra.mxu0 0.0
  %132 = vmatprep.subr.mxu0 0.0
  %133 = vmatpush1.msra.mxu0 0.0
  %134 = vmatprep.subr.mxu0 0.0
  %135 = vmatpush1.msra.mxu0 0.0
  %136 = vmatprep.subr.mxu0 0.0
  %137 = vmatpush1.msra.mxu0 0.0
  %138 = vmatprep.subr.mxu0 0.0
  %139 = vmatpush1.msra.mxu0 0.0
  %140 = vmatprep.subr.mxu0 0.0
  %141 = vmatpush1.msra.mxu0 0.0
  %142 = vmatprep.subr.mxu0 0.0
  %143 = vmatpush1.msra.mxu0 0.0
  %144 = vmatprep.subr.mxu0 0.0
  %145 = vmatpush1.msra.mxu0 0.0
  %146 = vmatprep.subr.mxu0 0.0
  %147 = vmatpush1.msra.mxu0 0.0
  %148 = vmatprep.subr.mxu0 0.0
  %149 = vmatpush1.msra.mxu0 0.0
  %150 = vmatprep.subr.mxu0 0.0
  %151 = vmatpush1.msra.mxu0 0.0
  %152 = vmatprep.subr.mxu0 0.0
  %153 = vmatpush1.msra.mxu0 0.0
  %154 = vmatprep.subr.mxu0 0.0
  %155 = vmatpush1.msra.mxu0 0.0
  %156 = vmatprep.subr.mxu0 0.0
  %157 = vmatpush1.msra.mxu0 0.0
  %158 = vmatprep.mubr.f32.mxu0 0.0
  %159 = vmatmul.mubr.f32.gmra.mrb[0].mxu0 %v71
  %v160 = vpop.f32.mrb[0].mxu0
  %v161 = vadd.f32 %v52, %v160
  %v162 = vpop.f32.mrb[0].mxu0
  %v163 = vadd.f32 %v56, %v162
  %164 = vmatprep.mubr.f32.mxu0 0.0
  %165 = vmatmul.mubr.f32.gmra.mrb[0].mxu0 %v74
  %v166 = vpop.f32.mrb[0].mxu0
  %v167 = vadd.f32 %v52, %v166
  %v168 = vpop.f32.mrb[0].mxu0
  %v169 = vadd.f32 %v56, %v168
  %170 = vmatprep.mubr.f32.mxu0 0.0
  %171 = vmatmul.mubr.f32.gmra.mrb[0].mxu0 %v77
  %v172 = vpop.f32.mrb[0].mxu0
  %v173 = vadd.f32 %v52, %v172
  %v174 = vpop.f32.mrb[0].mxu0
  %v175 = vadd.f32 %v56, %v174
  %176 = vmatprep.mubr.f32.mxu0 0.0
  %177 = vmatmul.mubr.f32.gmra.mrb[0].mxu0 %v80
  %v178 = vpop.f32.mrb[0].mxu0
  %v179 = vadd.f32 %v52, %v178
  %v180 = vpop.f32.mrb[0].mxu0
  %v181 = vadd.f32 %v56, %v180
  %182 = vmatprep.mubr.f32.mxu0 0.0
  %183 = vmatmul.mubr.f32.gmra.mrb[0].mxu0 %v83
  %v184 = vpop.f32.mrb[0].mxu0
  %v185 = vadd.f32 %v52, %v184
  %v186 = vpop.f32.mrb[0].mxu0
  %v187 = vadd.f32 %v56, %v186
  %188 = vmatprep.mubr.f32.mxu0 0.0
  %189 = vmatmul.mubr.f32.gmra.mrb[0].mxu0 %v86
  %v190 = vpop.f32.mrb[0].mxu0
  %v191 = vadd.f32 %v52, %v190
  %v192 = vpop.f32.mrb[0].mxu0
  %v193 = vadd.f32 %v56, %v192
  %194 = vmatprep.mubr.f32.mxu0 0.0
  %195 = vmatmul.mubr.f32.gmra.mrb[0].mxu0 %v89
  %v196 = vpop.f32.mrb[0].mxu0
  %v197 = vadd.f32 %v52, %v196
  %v198 = vpop.f32.mrb[0].mxu0
  %v199 = vadd.f32 %v56, %v198
  %200 = vmatprep.mubr.f32.mxu0 0.0
  %201 = vmatmul.mubr.f32.gmra.mrb[0].mxu0 %v92
  %v202 = vpop.f32.mrb[0].mxu0
  %v203 = vadd.f32 %v52, %v202
  %v204 = vpop.f32.mrb[0].mxu0
  %v205 = vadd.f32 %v56, %v204
  %206 = vdwg.mxu0
  %207 = vmatprep.subr.mxu0 %v34
  %208 = vmatpush1.msra.mxu0 %v33
  %209 = vmatprep.subr.mxu0 %v38
  %210 = vmatpush1.msra.mxu0 %v37
  %211 = vmatprep.subr.mxu0 %v42
  %212 = vmatpush1.msra.mxu0 %v41
  %213 = vmatprep.subr.mxu0 %v46
  %214 = vmatpush1.msra.mxu0 %v45
  %215 = vmatprep.subr.mxu0 0.0
  %216 = vmatpush1.msra.mxu0 0.0
  %217 = vmatprep.subr.mxu0 0.0
  %218 = vmatpush1.msra.mxu0 0.0
  %219 = vmatprep.subr.mxu0 0.0
  %220 = vmatpush1.msra.mxu0 0.0
  %221 = vmatprep.subr.mxu0 0.0
  %222 = vmatpush1.msra.mxu0 0.0
  %223 = vmatprep.subr.mxu0 0.0
  %224 = vmatpush1.msra.mxu0 0.0
  %225 = vmatprep.subr.mxu0 0.0
  %226 = vmatpush1.msra.mxu0 0.0
  %227 = vmatprep.subr.mxu0 0.0
  %228 = vmatpush1.msra.mxu0 0.0
  %229 = vmatprep.subr.mxu0 0.0
  %230 = vmatpush1.msra.mxu0 0.0
  %231 = vmatprep.subr.mxu0 0.0
  %232 = vmatpush1.msra.mxu0 0.0
  %233 = vmatprep.subr.mxu0 0.0
  %234 = vmatpush1.msra.mxu0 0.0
  %235 = vmatprep.subr.mxu0 0.0
  %236 = vmatpush1.msra.mxu0 0.0
  %237 = vmatprep.subr.mxu0 0.0
  %238 = vmatpush1.msra.mxu0 0.0
  %239 = vmatprep.subr.mxu0 0.0
  %240 = vmatpush1.msra.mxu0 0.0
  %241 = vmatprep.subr.mxu0 0.0
  %242 = vmatpush1.msra.mxu0 0.0
  %243 = vmatprep.subr.mxu0 0.0
  %244 = vmatpush1.msra.mxu0 0.0
  %245 = vmatprep.subr.mxu0 0.0
  %246 = vmatpush1.msra.mxu0 0.0
  %247 = vmatprep.subr.mxu0 0.0
  %248 = vmatpush1.msra.mxu0 0.0
  %249 = vmatprep.subr.mxu0 0.0
  %250 = vmatpush1.msra.mxu0 0.0
  %251 = vmatprep.subr.mxu0 0.0
  %252 = vmatpush1.msra.mxu0 0.0
  %253 = vmatprep.subr.mxu0 0.0
  %254 = vmatpush1.msra.mxu0 0.0
  %255 = vmatprep.subr.mxu0 0.0
  %256 = vmatpush1.msra.mxu0 0.0
  %257 = vmatprep.subr.mxu0 0.0
  %258 = vmatpush1.msra.mxu0 0.0
  %259 = vmatprep.subr.mxu0 0.0
  %260 = vmatpush1.msra.mxu0 0.0
  %261 = vmatprep.subr.mxu0 0.0
  %262 = vmatpush1.msra.mxu0 0.0
  %263 = vmatprep.subr.mxu0 0.0
  %264 = vmatpush1.msra.mxu0 0.0
  %265 = vmatprep.subr.mxu0 0.0
  %266 = vmatpush1.msra.mxu0 0.0
  %267 = vmatprep.subr.mxu0 0.0
  %268 = vmatpush1.msra.mxu0 0.0
  %269 = vmatprep.subr.mxu0 0.0
  %270 = vmatpush1.msra.mxu0 0.0
  %271 = vmatprep.mubr.f32.mxu0 0.0
  %272 = vmatmul.mubr.f32.gmra.mrb[0].mxu0 %v71
  %v273 = vpop.f32.mrb[0].mxu0
  %v274 = vadd.f32 %v60, %v273
  %v275 = vpop.f32.mrb[0].mxu0
  %v276 = vadd.f32 %v64, %v275
  %277 = vmatprep.mubr.f32.mxu0 0.0
  %278 = vmatmul.mubr.f32.gmra.mrb[0].mxu0 %v74
  %v279 = vpop.f32.mrb[0].mxu0
  %v280 = vadd.f32 %v60, %v279
  %v281 = vpop.f32.mrb[0].mxu0
  %v282 = vadd.f32 %v64, %v281
  %283 = vmatprep.mubr.f32.mxu0 0.0
  %284 = vmatmul.mubr.f32.gmra.mrb[0].mxu0 %v77
  %v285 = vpop.f32.mrb[0].mxu0
  %v286 = vadd.f32 %v60, %v285
  %v287 = vpop.f32.mrb[0].mxu0
  %v288 = vadd.f32 %v64, %v287
  %289 = vmatprep.mubr.f32.mxu0 0.0
  %290 = vmatmul.mubr.f32.gmra.mrb[0].mxu0 %v80
  %v291 = vpop.f32.mrb[0].mxu0
  %v292 = vadd.f32 %v60, %v291
  %v293 = vpop.f32.mrb[0].mxu0
  %v294 = vadd.f32 %v64, %v293
  %295 = vmatprep.mubr.f32.mxu0 0.0
  %296 = vmatmul.mubr.f32.gmra.mrb[0].mxu0 %v83
  %v297 = vpop.f32.mrb[0].mxu0
  %v298 = vadd.f32 %v60, %v297
  %v299 = vpop.f32.mrb[0].mxu0
  %v300 = vadd.f32 %v64, %v299
  %301 = vmatprep.mubr.f32.mxu0 0.0
  %302 = vmatmul.mubr.f32.gmra.mrb[0].mxu0 %v86
  %v303 = vpop.f32.mrb[0].mxu0
  %v304 = vadd.f32 %v60, %v303
  %v305 = vpop.f32.mrb[0].mxu0
  %v306 = vadd.f32 %v64, %v305
  %307 = vmatprep.mubr.f32.mxu0 0.0
  %308 = vmatmul.mubr.f32.gmra.mrb[0].mxu0 %v89
  %v309 = vpop.f32.mrb[0].mxu0
  %v310 = vadd.f32 %v60, %v309
  %v311 = vpop.f32.mrb[0].mxu0
  %v312 = vadd.f32 %v64, %v311
  %313 = vmatprep.mubr.f32.mxu0 0.0
  %314 = vmatmul.mubr.f32.gmra.mrb[0].mxu0 %v92
  %v315 = vpop.f32.mrb[0].mxu0
  %v316 = vadd.f32 %v60, %v315
  %v317 = vpop.f32.mrb[0].mxu0
  %v318 = vadd.f32 %v64, %v317
  %319 = vdwg.mxu0
  %320 = vst [vmem:[#allocation2] sm:$0xff] %v161
  %321 = vst [vmem:[#allocation2 + $0x8] sm:$0xff] %v163
  %322 = vst [vmem:[#allocation2 + $0x10] sm:$0xff] %v274
  %323 = vst [vmem:[#allocation2 + $0x18] sm:$0xff] %v276
  %324 = vst [vmem:[#allocation2 + $0x20] sm:$0xff] %v167
  %325 = vst [vmem:[#allocation2 + $0x28] sm:$0xff] %v169
  %326 = vst [vmem:[#allocation2 + $0x30] sm:$0xff] %v280
  %327 = vst [vmem:[#allocation2 + $0x38] sm:$0xff] %v282
  %328 = vst [vmem:[#allocation2 + $0x40] sm:$0xff] %v173
  %329 = vst [vmem:[#allocation2 + $0x48] sm:$0xff] %v175
  %330 = vst [vmem:[#allocation2 + $0x50] sm:$0xff] %v286
  %331 = vst [vmem:[#allocation2 + $0x58] sm:$0xff] %v288
  %332 = vst [vmem:[#allocation2 + $0x60] sm:$0xff] %v179
  %333 = vst [vmem:[#allocation2 + $0x68] sm:$0xff] %v181
  %334 = vst [vmem:[#allocation2 + $0x70] sm:$0xff] %v292
  %335 = vst [vmem:[#allocation2 + $0x78] sm:$0xff] %v294
  %336 = vst [vmem:[#allocation2 + $0x80] sm:$0xff] %v185
  %337 = vst [vmem:[#allocation2 + $0x88] sm:$0xff] %v187
  %338 = vst [vmem:[#allocation2 + $0x90] sm:$0xff] %v298
  %339 = vst [vmem:[#allocation2 + $0x98] sm:$0xff] %v300
  %340 = vst [vmem:[#allocation2 + $0xa0] sm:$0xff] %v191
  %341 = vst [vmem:[#allocation2 + $0xa8] sm:$0xff] %v193
  %342 = vst [vmem:[#allocation2 + $0xb0] sm:$0xff] %v304
  %343 = vst [vmem:[#allocation2 + $0xb8] sm:$0xff] %v306
  %344 = vst [vmem:[#allocation2 + $0xc0] sm:$0xff] %v197
  %345 = vst [vmem:[#allocation2 + $0xc8] sm:$0xff] %v199
  %346 = vst [vmem:[#allocation2 + $0xd0] sm:$0xff] %v310
  %347 = vst [vmem:[#allocation2 + $0xd8] sm:$0xff] %v312
  %348 = vst [vmem:[#allocation2 + $0xe0] sm:$0xff] %v203
  %349 = vst [vmem:[#allocation2 + $0xe8] sm:$0xff] %v205
  %350 = vst [vmem:[#allocation2 + $0xf0] sm:$0xff] %v316
  %351 = vst [vmem:[#allocation2 + $0xf8] sm:$0xff] %v318
  %v352 = vld [vmem:[#allocation2] sm:$0xff]
  %v353 = vld [vmem:[#allocation2 + $0x8] sm:$0xff]
  %v354 = vld [vmem:[#allocation2 + $0x10] sm:$0xff]
  %v355 = vld [vmem:[#allocation2 + $0x18] sm:$0xff]
  %v356 = vld [vmem:[%s2] sm:$0xff]
  %v357 = vld [vmem:[%s2 + $0x8] sm:$0xff]
  %v358 = vld [vmem:[%s2 + $0x10] sm:$0xff]
  %v359 = vld [vmem:[%s2 + $0x18] sm:$0xff]
  %v360 = vld [vmem:[%s2 + $0x20] sm:$0xff]
  %v361 = vld [vmem:[%s2 + $0x28] sm:$0xff]
  %v362 = vld [vmem:[%s2 + $0x30] sm:$0xff]
  %v363 = vld [vmem:[%s2 + $0x38] sm:$0xff]
  %v364 = vld [vmem:[%s2 + $0x40] sm:$0xff]
  %v365 = vld [vmem:[%s2 + $0x48] sm:$0xff]
  %v366 = vld [vmem:[%s2 + $0x50] sm:$0xff]
  %v367 = vld [vmem:[%s2 + $0x58] sm:$0xff]
  %v368 = vld [vmem:[%s2 + $0x60] sm:$0xff]
  %v369 = vld [vmem:[%s2 + $0x68] sm:$0xff]
  %v370 = vld [vmem:[%s2 + $0x70] sm:$0xff]
  %v371 = vld [vmem:[%s2 + $0x78] sm:$0xff]
  %v372 = vld [vmem:[%s2 + $0x80] sm:$0xff]
  %v373 = vld [vmem:[%s2 + $0x88] sm:$0xff]
  %v374 = vld [vmem:[%s2 + $0x90] sm:$0xff]
  %v375 = vld [vmem:[%s2 + $0x98] sm:$0xff]
  %v376 = vld [vmem:[%s2 + $0xa0] sm:$0xff]
  %v377 = vld [vmem:[%s2 + $0xa8] sm:$0xff]
  %v378 = vld [vmem:[%s2 + $0xb0] sm:$0xff]
  %v379 = vld [vmem:[%s2 + $0xb8] sm:$0xff]
  %v380 = vld [vmem:[%s2 + $0xc0] sm:$0xff]
  %v381 = vld [vmem:[%s2 + $0xc8] sm:$0xff]
  %v382 = vld [vmem:[%s2 + $0xd0] sm:$0xff]
  %v383 = vld [vmem:[%s2 + $0xd8] sm:$0xff]
  %v384 = vld [vmem:[%s2 + $0xe0] sm:$0xff]
  %v385 = vld [vmem:[%s2 + $0xe8] sm:$0xff]
  %v386 = vld [vmem:[%s2 + $0xf0] sm:$0xff]
  %v387 = vld [vmem:[%s2 + $0xf8] sm:$0xff]
  %v388 = vld [vmem:[%s2 + $0x100] sm:$0xff]
  %v389 = vld [vmem:[%s2 + $0x108] sm:$0xff]
  %v390 = vld [vmem:[%s2 + $0x110] sm:$0xff]
  %v391 = vld [vmem:[%s2 + $0x118] sm:$0xff]
  %v392 = vld [vmem:[%s2 + $0x120] sm:$0xff]
  %v393 = vld [vmem:[%s2 + $0x128] sm:$0xff]
  %v394 = vld [vmem:[%s2 + $0x130] sm:$0xff]
  %v395 = vld [vmem:[%s2 + $0x138] sm:$0xff]
  %v396 = vld [vmem:[%s2 + $0x140] sm:$0xff]
  %v397 = vld [vmem:[%s2 + $0x148] sm:$0xff]
  %v398 = vld [vmem:[%s2 + $0x150] sm:$0xff]
  %v399 = vld [vmem:[%s2 + $0x158] sm:$0xff]
  %v400 = vld [vmem:[%s2 + $0x160] sm:$0xff]
  %v401 = vld [vmem:[%s2 + $0x168] sm:$0xff]
  %v402 = vld [vmem:[%s2 + $0x170] sm:$0xff]
  %v403 = vld [vmem:[%s2 + $0x178] sm:$0xff]
  %v404 = vld [vmem:[%s2 + $0x180] sm:$0xff]
  %v405 = vld [vmem:[%s2 + $0x188] sm:$0xff]
  %v406 = vld [vmem:[%s2 + $0x190] sm:$0xff]
  %v407 = vld [vmem:[%s2 + $0x198] sm:$0xff]
  %v408 = vld [vmem:[%s2 + $0x1a0] sm:$0xff]
  %v409 = vld [vmem:[%s2 + $0x1a8] sm:$0xff]
  %v410 = vld [vmem:[%s2 + $0x1b0] sm:$0xff]
  %v411 = vld [vmem:[%s2 + $0x1b8] sm:$0xff]
  %v412 = vld [vmem:[%s2 + $0x1c0] sm:$0xff]
  %v413 = vld [vmem:[%s2 + $0x1c8] sm:$0xff]
  %v414 = vld [vmem:[%s2 + $0x1d0] sm:$0xff]
  %v415 = vld [vmem:[%s2 + $0x1d8] sm:$0xff]
  %v416 = vld [vmem:[%s2 + $0x1e0] sm:$0xff]
  %v417 = vld [vmem:[%s2 + $0x1e8] sm:$0xff]
  %v418 = vld [vmem:[%s2 + $0x1f0] sm:$0xff]
  %v419 = vld [vmem:[%s2 + $0x1f8] sm:$0xff]
  %420 = vmatprep.subr.mxu0 %v357
  %421 = vmatpush1.msra.mxu0 %v356
  %422 = vmatprep.subr.mxu0 %v361
  %423 = vmatpush1.msra.mxu0 %v360
  %424 = vmatprep.subr.mxu0 %v365
  %425 = vmatpush1.msra.mxu0 %v364
  %426 = vmatprep.subr.mxu0 %v369
  %427 = vmatpush1.msra.mxu0 %v368
  %428 = vmatprep.subr.mxu0 %v373
  %429 = vmatpush1.msra.mxu0 %v372
  %430 = vmatprep.subr.mxu0 %v377
  %431 = vmatpush1.msra.mxu0 %v376
  %432 = vmatprep.subr.mxu0 %v381
  %433 = vmatpush1.msra.mxu0 %v380
  %434 = vmatprep.subr.mxu0 %v385
  %435 = vmatpush1.msra.mxu0 %v384
  %436 = vmatprep.subr.mxu0 %v389
  %437 = vmatpush1.msra.mxu0 %v388
  %438 = vmatprep.subr.mxu0 %v393
  %439 = vmatpush1.msra.mxu0 %v392
  %440 = vmatprep.subr.mxu0 %v397
  %441 = vmatpush1.msra.mxu0 %v396
  %442 = vmatprep.subr.mxu0 %v401
  %443 = vmatpush1.msra.mxu0 %v400
  %444 = vmatprep.subr.mxu0 %v405
  %445 = vmatpush1.msra.mxu0 %v404
  %446 = vmatprep.subr.mxu0 %v409
  %447 = vmatpush1.msra.mxu0 %v408
  %448 = vmatprep.subr.mxu0 %v413
  %449 = vmatpush1.msra.mxu0 %v412
  %450 = vmatprep.subr.mxu0 %v417
  %451 = vmatpush1.msra.mxu0 %v416
  %452 = vmatprep.subr.mxu0 0.0
  %453 = vmatpush1.msra.mxu0 0.0
  %454 = vmatprep.subr.mxu0 0.0
  %455 = vmatpush1.msra.mxu0 0.0
  %456 = vmatprep.subr.mxu0 0.0
  %457 = vmatpush1.msra.mxu0 0.0
  %458 = vmatprep.subr.mxu0 0.0
  %459 = vmatpush1.msra.mxu0 0.0
  %460 = vmatprep.subr.mxu0 0.0
  %461 = vmatpush1.msra.mxu0 0.0
  %462 = vmatprep.subr.mxu0 0.0
  %463 = vmatpush1.msra.mxu0 0.0
  %464 = vmatprep.subr.mxu0 0.0
  %465 = vmatpush1.msra.mxu0 0.0
  %466 = vmatprep.subr.mxu0 0.0
  %467 = vmatpush1.msra.mxu0 0.0
  %468 = vmatprep.subr.mxu0 0.0
  %469 = vmatpush1.msra.mxu0 0.0
  %470 = vmatprep.subr.mxu0 0.0
  %471 = vmatpush1.msra.mxu0 0.0
  %472 = vmatprep.subr.mxu0 0.0
  %473 = vmatpush1.msra.mxu0 0.0
  %474 = vmatprep.subr.mxu0 0.0
  %475 = vmatpush1.msra.mxu0 0.0
  %476 = vmatprep.subr.mxu0 0.0
  %477 = vmatpush1.msra.mxu0 0.0
  %478 = vmatprep.subr.mxu0 0.0
  %479 = vmatpush1.msra.mxu0 0.0
  %480 = vmatprep.subr.mxu0 0.0
  %481 = vmatpush1.msra.mxu0 0.0
  %482 = vmatprep.subr.mxu0 0.0
  %483 = vmatpush1.msra.mxu0 0.0
  %484 = vmatprep.mubr.f32.mxu0 0.0
  %485 = vmatmul.mubr.f32.gmra.mrb[0].mxu0 0.0
  %v486 = vpop.f32.mrb[0].mxu0
  %v487 = vadd.f32 0.0, %v486
  %v488 = vpop.f32.mrb[0].mxu0
  %v489 = vadd.f32 0.0, %v488
  %490 = vdwg.mxu0
  %491 = vmatprep.subr.mxu0 %v359
  %492 = vmatpush1.msra.mxu0 %v358
  %493 = vmatprep.subr.mxu0 %v363
  %494 = vmatpush1.msra.mxu0 %v362
  %495 = vmatprep.subr.mxu0 %v367
  %496 = vmatpush1.msra.mxu0 %v366
  %497 = vmatprep.subr.mxu0 %v371
  %498 = vmatpush1.msra.mxu0 %v370
  %499 = vmatprep.subr.mxu0 %v375
  %500 = vmatpush1.msra.mxu0 %v374
  %501 = vmatprep.subr.mxu0 %v379
  %502 = vmatpush1.msra.mxu0 %v378
  %503 = vmatprep.subr.mxu0 %v383
  %504 = vmatpush1.msra.mxu0 %v382
  %505 = vmatprep.subr.mxu0 %v387
  %506 = vmatpush1.msra.mxu0 %v386
  %507 = vmatprep.subr.mxu0 %v391
  %508 = vmatpush1.msra.mxu0 %v390
  %509 = vmatprep.subr.mxu0 %v395
  %510 = vmatpush1.msra.mxu0 %v394
  %511 = vmatprep.subr.mxu0 %v399
  %512 = vmatpush1.msra.mxu0 %v398
  %513 = vmatprep.subr.mxu0 %v403
  %514 = vmatpush1.msra.mxu0 %v402
  %515 = vmatprep.subr.mxu0 %v407
  %516 = vmatpush1.msra.mxu0 %v406
  %517 = vmatprep.subr.mxu0 %v411
  %518 = vmatpush1.msra.mxu0 %v410
  %519 = vmatprep.subr.mxu0 %v415
  %520 = vmatpush1.msra.mxu0 %v414
  %521 = vmatprep.subr.mxu0 %v419
  %522 = vmatpush1.msra.mxu0 %v418
  %523 = vmatprep.subr.mxu0 0.0
  %524 = vmatpush1.msra.mxu0 0.0
  %525 = vmatprep.subr.mxu0 0.0
  %526 = vmatpush1.msra.mxu0 0.0
  %527 = vmatprep.subr.mxu0 0.0
  %528 = vmatpush1.msra.mxu0 0.0
  %529 = vmatprep.subr.mxu0 0.0
  %530 = vmatpush1.msra.mxu0 0.0
  %531 = vmatprep.subr.mxu0 0.0
  %532 = vmatpush1.msra.mxu0 0.0
  %533 = vmatprep.subr.mxu0 0.0
  %534 = vmatpush1.msra.mxu0 0.0
  %535 = vmatprep.subr.mxu0 0.0
  %536 = vmatpush1.msra.mxu0 0.0
  %537 = vmatprep.subr.mxu0 0.0
  %538 = vmatpush1.msra.mxu0 0.0
  %539 = vmatprep.subr.mxu0 0.0
  %540 = vmatpush1.msra.mxu0 0.0
  %541 = vmatprep.subr.mxu0 0.0
  %542 = vmatpush1.msra.mxu0 0.0
  %543 = vmatprep.subr.mxu0 0.0
  %544 = vmatpush1.msra.mxu0 0.0
  %545 = vmatprep.subr.mxu0 0.0
  %546 = vmatpush1.msra.mxu0 0.0
  %547 = vmatprep.subr.mxu0 0.0
  %548 = vmatpush1.msra.mxu0 0.0
  %549 = vmatprep.subr.mxu0 0.0
  %550 = vmatpush1.msra.mxu0 0.0
  %551 = vmatprep.subr.mxu0 0.0
  %552 = vmatpush1.msra.mxu0 0.0
  %553 = vmatprep.subr.mxu0 0.0
  %554 = vmatpush1.msra.mxu0 0.0
  %555 = vmatprep.mubr.f32.mxu0 0.0
  %556 = vmatmul.mubr.f32.gmra.mrb[0].mxu0 0.0
  %v557 = vpop.f32.mrb[0].mxu0
  %v558 = vadd.f32 0.0, %v557
  %v559 = vpop.f32.mrb[0].mxu0
  %v560 = vadd.f32 0.0, %v559
  %561 = vdwg.mxu0
  %v562 = vadd.f32 %v352, %v487
  %v563 = vadd.f32 %v353, %v489
  %v564 = vadd.f32 %v354, %v558
  %v565 = vadd.f32 %v355, %v560
  %v566 = vxor.u32 %v562, 2147483648
  %v567 = vmul.f32 %v566, 1.442695
  %v568 = vpow.pop %v567
  %v569 = vadd.f32 %v568, 1.0
  %v570 = vrcp.pop %v569
  %v571 = vmul.f32 1.0, %v570
  %v572 = vxor.u32 %v563, 2147483648
  %v573 = vmul.f32 %v572, 1.442695
  %v574 = vpow.pop %v573
  %v575 = vadd.f32 %v574, 1.0
  %v576 = vrcp.pop %v575
  %v577 = vmul.f32 1.0, %v576
  %v578 = vtanh.pop %v564
  %v579 = vxor.u32 %v565, 2147483648
  %v580 = vmul.f32 %v579, 1.442695
  %v581 = vpow.pop %v580
  %v582 = vadd.f32 %v581, 1.0
  %v583 = vrcp.pop %v582
  %v584 = vmul.f32 1.0, %v583
  %v585 = vmul.f32 %v577, 0.0
  %v586 = vmul.f32 %v571, %v578
  %v587 = vadd.f32 %v585, %v586
  %v588 = vtanh.pop %v587
  %v589 = vmul.f32 %v584, %v588
  %590 = vst [vmem:[#allocation3] sm:$0xff] %v589
  %v591 = vld [vmem:[#allocation2 + $0x20] sm:$0xff]
  %v592 = vld [vmem:[#allocation2 + $0x28] sm:$0xff]
  %v593 = vld [vmem:[#allocation2 + $0x30] sm:$0xff]
  %v594 = vld [vmem:[#allocation2 + $0x38] sm:$0xff]
  %v595 = vld [vmem:[%s2] sm:$0xff]
  %v596 = vld [vmem:[%s2 + $0x8] sm:$0xff]
  %v597 = vld [vmem:[%s2 + $0x10] sm:$0xff]
  %v598 = vld [vmem:[%s2 + $0x18] sm:$0xff]
  %v599 = vld [vmem:[%s2 + $0x20] sm:$0xff]
  %v600 = vld [vmem:[%s2 + $0x28] sm:$0xff]
  %v601 = vld [vmem:[%s2 + $0x30] sm:$0xff]
  %v602 = vld [vmem:[%s2 + $0x38] sm:$0xff]
  %v603 = vld [vmem:[%s2 + $0x40] sm:$0xff]
  %v604 = vld [vmem:[%s2 + $0x48] sm:$0xff]
  %v605 = vld [vmem:[%s2 + $0x50] sm:$0xff]
  %v606 = vld [vmem:[%s2 + $0x58] sm:$0xff]
  %v607 = vld [vmem:[%s2 + $0x60] sm:$0xff]
  %v608 = vld [vmem:[%s2 + $0x68] sm:$0xff]
  %v609 = vld [vmem:[%s2 + $0x70] sm:$0xff]
  %v610 = vld [vmem:[%s2 + $0x78] sm:$0xff]
  %v611 = vld [vmem:[%s2 + $0x80] sm:$0xff]
  %v612 = vld [vmem:[%s2 + $0x88] sm:$0xff]
  %v613 = vld [vmem:[%s2 + $0x90] sm:$0xff]
  %v614 = vld [vmem:[%s2 + $0x98] sm:$0xff]
  %v615 = vld [vmem:[%s2 + $0xa0] sm:$0xff]
  %v616 = vld [vmem:[%s2 + $0xa8] sm:$0xff]
  %v617 = vld [vmem:[%s2 + $0xb0] sm:$0xff]
  %v618 = vld [vmem:[%s2 + $0xb8] sm:$0xff]
  %v619 = vld [vmem:[%s2 + $0xc0] sm:$0xff]
  %v620 = vld [vmem:[%s2 + $0xc8] sm:$0xff]
  %v621 = vld [vmem:[%s2 + $0xd0] sm:$0xff]
  %v622 = vld [vmem:[%s2 + $0xd8] sm:$0xff]
  %v623 = vld [vmem:[%s2 + $0xe0] sm:$0xff]
  %v624 = vld [vmem:[%s2 + $0xe8] sm:$0xff]
  %v625 = vld [vmem:[%s2 + $0xf0] sm:$0xff]
  %v626 = vld [vmem:[%s2 + $0xf8] sm:$0xff]
  %v627 = vld [vmem:[%s2 + $0x100] sm:$0xff]
  %v628 = vld [vmem:[%s2 + $0x108] sm:$0xff]
  %v629 = vld [vmem:[%s2 + $0x110] sm:$0xff]
  %v630 = vld [vmem:[%s2 + $0x118] sm:$0xff]
  %v631 = vld [vmem:[%s2 + $0x120] sm:$0xff]
  %v632 = vld [vmem:[%s2 + $0x128] sm:$0xff]
  %v633 = vld [vmem:[%s2 + $0x130] sm:$0xff]
  %v634 = vld [vmem:[%s2 + $0x138] sm:$0xff]
  %v635 = vld [vmem:[%s2 + $0x140] sm:$0xff]
  %v636 = vld [vmem:[%s2 + $0x148] sm:$0xff]
  %v637 = vld [vmem:[%s2 + $0x150] sm:$0xff]
  %v638 = vld [vmem:[%s2 + $0x158] sm:$0xff]
  %v639 = vld [vmem:[%s2 + $0x160] sm:$0xff]
  %v640 = vld [vmem:[%s2 + $0x168] sm:$0xff]
  %v641 = vld [vmem:[%s2 + $0x170] sm:$0xff]
  %v642 = vld [vmem:[%s2 + $0x178] sm:$0xff]
  %v643 = vld [vmem:[%s2 + $0x180] sm:$0xff]
  %v644 = vld [vmem:[%s2 + $0x188] sm:$0xff]
  %v645 = vld [vmem:[%s2 + $0x190] sm:$0xff]
  %v646 = vld [vmem:[%s2 + $0x198] sm:$0xff]
  %v647 = vld [vmem:[%s2 + $0x1a0] sm:$0xff]
  %v648 = vld [vmem:[%s2 + $0x1a8] sm:$0xff]
  %v649 = vld [vmem:[%s2 + $0x1b0] sm:$0xff]
  %v650 = vld [vmem:[%s2 + $0x1b8] sm:$0xff]
  %v651 = vld [vmem:[%s2 + $0x1c0] sm:$0xff]
  %v652 = vld [vmem:[%s2 + $0x1c8] sm:$0xff]
  %v653 = vld [vmem:[%s2 + $0x1d0] sm:$0xff]
  %v654 = vld [vmem:[%s2 + $0x1d8] sm:$0xff]
  %v655 = vld [vmem:[%s2 + $0x1e0] sm:$0xff]
  %v656 = vld [vmem:[%s2 + $0x1e8] sm:$0xff]
  %v657 = vld [vmem:[%s2 + $0x1f0] sm:$0xff]
  %v658 = vld [vmem:[%s2 + $0x1f8] sm:$0xff]
  %659 = vmatprep.subr.mxu0 %v596
  %660 = vmatpush1.msra.mxu0 %v595
  %661 = vmatprep.subr.mxu0 %v600
  %662 = vmatpush1.msra.mxu0 %v599
  %663 = vmatprep.subr.mxu0 %v604
  %664 = vmatpush1.msra.mxu0 %v603
  %665 = vmatprep.subr.mxu0 %v608
  %666 = vmatpush1.msra.mxu0 %v607
  %667 = vmatprep.subr.mxu0 %v612
  %668 = vmatpush1.msra.mxu0 %v611
  %669 = vmatprep.subr.mxu0 %v616
  %670 = vmatpush1.msra.mxu0 %v615
  %671 = vmatprep.subr.mxu0 %v620
  %672 = vmatpush1.msra.mxu0 %v619
  %673 = vmatprep.subr.mxu0 %v624
  %674 = vmatpush1.msra.mxu0 %v623
  %675 = vmatprep.subr.mxu0 %v628
  %676 = vmatpush1.msra.mxu0 %v627
  %677 = vmatprep.subr.mxu0 %v632
  %678 = vmatpush1.msra.mxu0 %v631
  %679 = vmatprep.subr.mxu0 %v636
  %680 = vmatpush1.msra.mxu0 %v635
  %681 = vmatprep.subr.mxu0 %v640
  %682 = vmatpush1.msra.mxu0 %v639
  %683 = vmatprep.subr.mxu0 %v644
  %684 = vmatpush1.msra.mxu0 %v643
  %685 = vmatprep.subr.mxu0 %v648
  %686 = vmatpush1.msra.mxu0 %v647
  %687 = vmatprep.subr.mxu0 %v652
  %688 = vmatpush1.msra.mxu0 %v651
  %689 = vmatprep.subr.mxu0 %v656
  %690 = vmatpush1.msra.mxu0 %v655
  %691 = vmatprep.subr.mxu0 0.0
  %692 = vmatpush1.msra.mxu0 0.0
  %693 = vmatprep.subr.mxu0 0.0
  %694 = vmatpush1.msra.mxu0 0.0
  %695 = vmatprep.subr.mxu0 0.0
  %696 = vmatpush1.msra.mxu0 0.0
  %697 = vmatprep.subr.mxu0 0.0
  %698 = vmatpush1.msra.mxu0 0.0
  %699 = vmatprep.subr.mxu0 0.0
  %700 = vmatpush1.msra.mxu0 0.0
  %701 = vmatprep.subr.mxu0 0.0
  %702 = vmatpush1.msra.mxu0 0.0
  %703 = vmatprep.subr.mxu0 0.0
  %704 = vmatpush1.msra.mxu0 0.0
  %705 = vmatprep.subr.mxu0 0.0
  %706 = vmatpush1.msra.mxu0 0.0
  %707 = vmatprep.subr.mxu0 0.0
  %708 = vmatpush1.msra.mxu0 0.0
  %709 = vmatprep.subr.mxu0 0.0
  %710 = vmatpush1.msra.mxu0 0.0
  %711 = vmatprep.subr.mxu0 0.0
  %712 = vmatpush1.msra.mxu0 0.0
  %713 = vmatprep.subr.mxu0 0.0
  %714 = vmatpush1.msra.mxu0 0.0
  %715 = vmatprep.subr.mxu0 0.0
  %716 = vmatpush1.msra.mxu0 0.0
  %717 = vmatprep.subr.mxu0 0.0
  %718 = vmatpush1.msra.mxu0 0.0
  %719 = vmatprep.subr.mxu0 0.0
  %720 = vmatpush1.msra.mxu0 0.0
  %721 = vmatprep.subr.mxu0 0.0
  %722 = vmatpush1.msra.mxu0 0.0
  %723 = vmatprep.mubr.f32.mxu0 0.0
  %724 = vmatmul.mubr.f32.gmra.mrb[0].mxu0 %v589
  %v725 = vpop.f32.mrb[0].mxu0
  %v726 = vadd.f32 0.0, %v725
  %v727 = vpop.f32.mrb[0].mxu0
  %v728 = vadd.f32 0.0, %v727
  %729 = vdwg.mxu0
  %730 = vmatprep.subr.mxu0 %v598
  %731 = vmatpush1.msra.mxu0 %v597
  %732 = vmatprep.subr.mxu0 %v602
  %733 = vmatpush1.msra.mxu0 %v601
  %734 = vmatprep.subr.mxu0 %v606
  %735 = vmatpush1.msra.mxu0 %v605
  %736 = vmatprep.subr.mxu0 %v610
  %737 = vmatpush1.msra.mxu0 %v609
  %738 = vmatprep.subr.mxu0 %v614
  %739 = vmatpush1.msra.mxu0 %v613
  %740 = vmatprep.subr.mxu0 %v618
  %741 = vmatpush1.msra.mxu0 %v617
  %742 = vmatprep.subr.mxu0 %v622
  %743 = vmatpush1.msra.mxu0 %v621
  %744 = vmatprep.subr.mxu0 %v626
  %745 = vmatpush1.msra.mxu0 %v625
  %746 = vmatprep.subr.mxu0 %v630
  %747 = vmatpush1.msra.mxu0 %v629
  %748 = vmatprep.subr.mxu0 %v634
  %749 = vmatpush1.msra.mxu0 %v633
  %750 = vmatprep.subr.mxu0 %v638
  %751 = vmatpush1.msra.mxu0 %v637
  %752 = vmatprep.subr.mxu0 %v642
  %753 = vmatpush1.msra.mxu0 %v641
  %754 = vmatprep.subr.mxu0 %v646
  %755 = vmatpush1.msra.mxu0 %v645
  %756 = vmatprep.subr.mxu0 %v650
  %757 = vmatpush1.msra.mxu0 %v649
  %758 = vmatprep.subr.mxu0 %v654
  %759 = vmatpush1.msra.mxu0 %v653
  %760 = vmatprep.subr.mxu0 %v658
  %761 = vmatpush1.msra.mxu0 %v657
  %762 = vmatprep.subr.mxu0 0.0
  %763 = vmatpush1.msra.mxu0 0.0
  %764 = vmatprep.subr.mxu0 0.0
  %765 = vmatpush1.msra.mxu0 0.0
  %766 = vmatprep.subr.mxu0 0.0
  %767 = vmatpush1.msra.mxu0 0.0
  %768 = vmatprep.subr.mxu0 0.0
  %769 = vmatpush1.msra.mxu0 0.0
  %770 = vmatprep.subr.mxu0 0.0
  %771 = vmatpush1.msra.mxu0 0.0
  %772 = vmatprep.subr.mxu0 0.0
  %773 = vmatpush1.msra.mxu0 0.0
  %774 = vmatprep.subr.mxu0 0.0
  %775 = vmatpush1.msra.mxu0 0.0
  %776 = vmatprep.subr.mxu0 0.0
  %777 = vmatpush1.msra.mxu0 0.0
  %778 = vmatprep.subr.mxu0 0.0
  %779 = vmatpush1.msra.mxu0 0.0
  %780 = vmatprep.subr.mxu0 0.0
  %781 = vmatpush1.msra.mxu0 0.0
  %782 = vmatprep.subr.mxu0 0.0
  %783 = vmatpush1.msra.mxu0 0.0
  %784 = vmatprep.subr.mxu0 0.0
  %785 = vmatpush1.msra.mxu0 0.0
  %786 = vmatprep.subr.mxu0 0.0
  %787 = vmatpush1.msra.mxu0 0.0
  %788 = vmatprep.subr.mxu0 0.0
  %789 = vmatpush1.msra.mxu0 0.0
  %790 = vmatprep.subr.mxu0 0.0
  %791 = vmatpush1.msra.mxu0 0.0
  %792 = vmatprep.subr.mxu0 0.0
  %793 = vmatpush1.msra.mxu0 0.0
  %794 = vmatprep.mubr.f32.mxu0 0.0
  %795 = vmatmul.mubr.f32.gmra.mrb[0].mxu0 %v589
  %v796 = vpop.f32.mrb[0].mxu0
  %v797 = vadd.f32 0.0, %v796
  %v798 = vpop.f32.mrb[0].mxu0
  %v799 = vadd.f32 0.0, %v798
  %800 = vdwg.mxu0
  %v801 = vadd.f32 %v591, %v726
  %v802 = vadd.f32 %v592, %v728
  %v803 = vadd.f32 %v593, %v797
  %v804 = vadd.f32 %v594, %v799
  %v805 = vxor.u32 %v801, 2147483648
  %v806 = vmul.f32 %v805, 1.442695
  %v807 = vpow.pop %v806
  %v808 = vadd.f32 %v807, 1.0
  %v809 = vrcp.pop %v808
  %v810 = vmul.f32 1.0, %v809
  %v811 = vxor.u32 %v802, 2147483648
  %v812 = vmul.f32 %v811, 1.442695
  %v813 = vpow.pop %v812
  %v814 = vadd.f32 %v813, 1.0
  %v815 = vrcp.pop %v814
  %v816 = vmul.f32 1.0, %v815
  %v817 = vtanh.pop %v803
  %v818 = vxor.u32 %v804, 2147483648
  %v819 = vmul.f32 %v818, 1.442695
  %v820 = vpow.pop %v819
  %v821 = vadd.f32 %v820, 1.0
  %v822 = vrcp.pop %v821
  %v823 = vmul.f32 1.0, %v822
  %v824 = vmul.f32 %v816, %v587
  %v825 = vmul.f32 %v810, %v817
  %v826 = vadd.f32 %v824, %v825
  %v827 = vtanh.pop %v826
  %v828 = vmul.f32 %v823, %v827
  %829 = vst [vmem:[#allocation3 + $0x8] sm:$0xff] %v828
  %v830 = vld [vmem:[#allocation2 + $0x40] sm:$0xff]
  %v831 = vld [vmem:[#allocation2 + $0x48] sm:$0xff]
  %v832 = vld [vmem:[#allocation2 + $0x50] sm:$0xff]
  %v833 = vld [vmem:[#allocation2 + $0x58] sm:$0xff]
  %v834 = vld [vmem:[%s2] sm:$0xff]
  %v835 = vld [vmem:[%s2 + $0x8] sm:$0xff]
  %v836 = vld [vmem:[%s2 + $0x10] sm:$0xff]
  %v837 = vld [vmem:[%s2 + $0x18] sm:$0xff]
  %v838 = vld [vmem:[%s2 + $0x20] sm:$0xff]
  %v839 = vld [vmem:[%s2 + $0x28] sm:$0xff]
  %v840 = vld [vmem:[%s2 + $0x30] sm:$0xff]
  %v841 = vld [vmem:[%s2 + $0x38] sm:$0xff]
  %v842 = vld [vmem:[%s2 + $0x40] sm:$0xff]
  %v843 = vld [vmem:[%s2 + $0x48] sm:$0xff]
  %v844 = vld [vmem:[%s2 + $0x50] sm:$0xff]
  %v845 = vld [vmem:[%s2 + $0x58] sm:$0xff]
  %v846 = vld [vmem:[%s2 + $0x60] sm:$0xff]
  %v847 = vld [vmem:[%s2 + $0x68] sm:$0xff]
  %v848 = vld [vmem:[%s2 + $0x70] sm:$0xff]
  %v849 = vld [vmem:[%s2 + $0x78] sm:$0xff]
  %v850 = vld [vmem:[%s2 + $0x80] sm:$0xff]
  %v851 = vld [vmem:[%s2 + $0x88] sm:$0xff]
  %v852 = vld [vmem:[%s2 + $0x90] sm:$0xff]
  %v853 = vld [vmem:[%s2 + $0x98] sm:$0xff]
  %v854 = vld [vmem:[%s2 + $0xa0] sm:$0xff]
  %v855 = vld [vmem:[%s2 + $0xa8] sm:$0xff]
  %v856 = vld [vmem:[%s2 + $0xb0] sm:$0xff]
  %v857 = vld [vmem:[%s2 + $0xb8] sm:$0xff]
  %v858 = vld [vmem:[%s2 + $0xc0] sm:$0xff]
  %v859 = vld [vmem:[%s2 + $0xc8] sm:$0xff]
  %v860 = vld [vmem:[%s2 + $0xd0] sm:$0xff]
  %v861 = vld [vmem:[%s2 + $0xd8] sm:$0xff]
  %v862 = vld [vmem:[%s2 + $0xe0] sm:$0xff]
  %v863 = vld [vmem:[%s2 + $0xe8] sm:$0xff]
  %v864 = vld [vmem:[%s2 + $0xf0] sm:$0xff]
  %v865 = vld [vmem:[%s2 + $0xf8] sm:$0xff]
  %v866 = vld [vmem:[%s2 + $0x100] sm:$0xff]
  %v867 = vld [vmem:[%s2 + $0x108] sm:$0xff]
  %v868 = vld [vmem:[%s2 + $0x110] sm:$0xff]
  %v869 = vld [vmem:[%s2 + $0x118] sm:$0xff]
  %v870 = vld [vmem:[%s2 + $0x120] sm:$0xff]
  %v871 = vld [vmem:[%s2 + $0x128] sm:$0xff]
  %v872 = vld [vmem:[%s2 + $0x130] sm:$0xff]
  %v873 = vld [vmem:[%s2 + $0x138] sm:$0xff]
  %v874 = vld [vmem:[%s2 + $0x140] sm:$0xff]
  %v875 = vld [vmem:[%s2 + $0x148] sm:$0xff]
  %v876 = vld [vmem:[%s2 + $0x150] sm:$0xff]
  %v877 = vld [vmem:[%s2 + $0x158] sm:$0xff]
  %v878 = vld [vmem:[%s2 + $0x160] sm:$0xff]
  %v879 = vld [vmem:[%s2 + $0x168] sm:$0xff]
  %v880 = vld [vmem:[%s2 + $0x170] sm:$0xff]
  %v881 = vld [vmem:[%s2 + $0x178] sm:$0xff]
  %v882 = vld [vmem:[%s2 + $0x180] sm:$0xff]
  %v883 = vld [vmem:[%s2 + $0x188] sm:$0xff]
  %v884 = vld [vmem:[%s2 + $0x190] sm:$0xff]
  %v885 = vld [vmem:[%s2 + $0x198] sm:$0xff]
  %v886 = vld [vmem:[%s2 + $0x1a0] sm:$0xff]
  %v887 = vld [vmem:[%s2 + $0x1a8] sm:$0xff]
  %v888 = vld [vmem:[%s2 + $0x1b0] sm:$0xff]
  %v889 = vld [vmem:[%s2 + $0x1b8] sm:$0xff]
  %v890 = vld [vmem:[%s2 + $0x1c0] sm:$0xff]
  %v891 = vld [vmem:[%s2 + $0x1c8] sm:$0xff]
  %v892 = vld [vmem:[%s2 + $0x1d0] sm:$0xff]
  %v893 = vld [vmem:[%s2 + $0x1d8] sm:$0xff]
  %v894 = vld [vmem:[%s2 + $0x1e0] sm:$0xff]
  %v895 = vld [vmem:[%s2 + $0x1e8] sm:$0xff]
  %v896 = vld [vmem:[%s2 + $0x1f0] sm:$0xff]
  %v897 = vld [vmem:[%s2 + $0x1f8] sm:$0xff]
  %898 = vmatprep.subr.mxu0 %v835
  %899 = vmatpush1.msra.mxu0 %v834
  %900 = vmatprep.subr.mxu0 %v839
  %901 = vmatpush1.msra.mxu0 %v838
  %902 = vmatprep.subr.mxu0 %v843
  %903 = vmatpush1.msra.mxu0 %v842
  %904 = vmatprep.subr.mxu0 %v847
  %905 = vmatpush1.msra.mxu0 %v846
  %906 = vmatprep.subr.mxu0 %v851
  %907 = vmatpush1.msra.mxu0 %v850
  %908 = vmatprep.subr.mxu0 %v855
  %909 = vmatpush1.msra.mxu0 %v854
  %910 = vmatprep.subr.mxu0 %v859
  %911 = vmatpush1.msra.mxu0 %v858
  %912 = vmatprep.subr.mxu0 %v863
  %913 = vmatpush1.msra.mxu0 %v862
  %914 = vmatprep.subr.mxu0 %v867
  %915 = vmatpush1.msra.mxu0 %v866
  %916 = vmatprep.subr.mxu0 %v871
  %917 = vmatpush1.msra.mxu0 %v870
  %918 = vmatprep.subr.mxu0 %v875
  %919 = vmatpush1.msra.mxu0 %v874
  %920 = vmatprep.subr.mxu0 %v879
  %921 = vmatpush1.msra.mxu0 %v878
  %922 = vmatprep.subr.mxu0 %v883
  %923 = vmatpush1.msra.mxu0 %v882
  %924 = vmatprep.subr.mxu0 %v887
  %925 = vmatpush1.msra.mxu0 %v886
  %926 = vmatprep.subr.mxu0 %v891
  %927 = vmatpush1.msra.mxu0 %v890
  %928 = vmatprep.subr.mxu0 %v895
  %929 = vmatpush1.msra.mxu0 %v894
  %930 = vmatprep.subr.mxu0 0.0
  %931 = vmatpush1.msra.mxu0 0.0
  %932 = vmatprep.subr.mxu0 0.0
  %933 = vmatpush1.msra.mxu0 0.0
  %934 = vmatprep.subr.mxu0 0.0
  %935 = vmatpush1.msra.mxu0 0.0
  %936 = vmatprep.subr.mxu0 0.0
  %937 = vmatpush1.msra.mxu0 0.0
  %938 = vmatprep.subr.mxu0 0.0
  %939 = vmatpush1.msra.mxu0 0.0
  %940 = vmatprep.subr.mxu0 0.0
  %941 = vmatpush1.msra.mxu0 0.0
  %942 = vmatprep.subr.mxu0 0.0
  %943 = vmatpush1.msra.mxu0 0.0
  %944 = vmatprep.subr.mxu0 0.0
  %945 = vmatpush1.msra.mxu0 0.0
  %946 = vmatprep.subr.mxu0 0.0
  %947 = vmatpush1.msra.mxu0 0.0
  %948 = vmatprep.subr.mxu0 0.0
  %949 = vmatpush1.msra.mxu0 0.0
  %950 = vmatprep.subr.mxu0 0.0
  %951 = vmatpush1.msra.mxu0 0.0
  %952 = vmatprep.subr.mxu0 0.0
  %953 = vmatpush1.msra.mxu0 0.0
  %954 = vmatprep.subr.mxu0 0.0
  %955 = vmatpush1.msra.mxu0 0.0
  %956 = vmatprep.subr.mxu0 0.0
  %957 = vmatpush1.msra.mxu0 0.0
  %958 = vmatprep.subr.mxu0 0.0
  %959 = vmatpush1.msra.mxu0 0.0
  %960 = vmatprep.subr.mxu0 0.0
  %961 = vmatpush1.msra.mxu0 0.0
  %962 = vmatprep.mubr.f32.mxu0 0.0
  %963 = vmatmul.mubr.f32.gmra.mrb[0].mxu0 %v828
  %v964 = vpop.f32.mrb[0].mxu0
  %v965 = vadd.f32 0.0, %v964
  %v966 = vpop.f32.mrb[0].mxu0
  %v967 = vadd.f32 0.0, %v966
  %968 = vdwg.mxu0
  %969 = vmatprep.subr.mxu0 %v837
  %970 = vmatpush1.msra.mxu0 %v836
  %971 = vmatprep.subr.mxu0 %v841
  %972 = vmatpush1.msra.mxu0 %v840
  %973 = vmatprep.subr.mxu0 %v845
  %974 = vmatpush1.msra.mxu0 %v844
  %975 = vmatprep.subr.mxu0 %v849
  %976 = vmatpush1.msra.mxu0 %v848
  %977 = vmatprep.subr.mxu0 %v853
  %978 = vmatpush1.msra.mxu0 %v852
  %979 = vmatprep.subr.mxu0 %v857
  %980 = vmatpush1.msra.mxu0 %v856
  %981 = vmatprep.subr.mxu0 %v861
  %982 = vmatpush1.msra.mxu0 %v860
  %983 = vmatprep.subr.mxu0 %v865
  %984 = vmatpush1.msra.mxu0 %v864
  %985 = vmatprep.subr.mxu0 %v869
  %986 = vmatpush1.msra.mxu0 %v868
  %987 = vmatprep.subr.mxu0 %v873
  %988 = vmatpush1.msra.mxu0 %v872
  %989 = vmatprep.subr.mxu0 %v877
  %990 = vmatpush1.msra.mxu0 %v876
  %991 = vmatprep.subr.mxu0 %v881
  %992 = vmatpush1.msra.mxu0 %v880
  %993 = vmatprep.subr.mxu0 %v885
  %994 = vmatpush1.msra.mxu0 %v884
  %995 = vmatprep.subr.mxu0 %v889
  %996 = vmatpush1.msra.mxu0 %v888
  %997 = vmatprep.subr.mxu0 %v893
  %998 = vmatpush1.msra.mxu0 %v892
  %999 = vmatprep.subr.mxu0 %v897
  %1000 = vmatpush1.msra.mxu0 %v896
  %1001 = vmatprep.subr.mxu0 0.0
  %1002 = vmatpush1.msra.mxu0 0.0
  %1003 = vmatprep.subr.mxu0 0.0
  %1004 = vmatpush1.msra.mxu0 0.0
  %1005 = vmatprep.subr.mxu0 0.0
  %1006 = vmatpush1.msra.mxu0 0.0
  %1007 = vmatprep.subr.mxu0 0.0
  %1008 = vmatpush1.msra.mxu0 0.0
  %1009 = vmatprep.subr.mxu0 0.0
  %1010 = vmatpush1.msra.mxu0 0.0
  %1011 = vmatprep.subr.mxu0 0.0
  %1012 = vmatpush1.msra.mxu0 0.0
  %1013 = vmatprep.subr.mxu0 0.0
  %1014 = vmatpush1.msra.mxu0 0.0
  %1015 = vmatprep.subr.mxu0 0.0
  %1016 = vmatpush1.msra.mxu0 0.0
  %1017 = vmatprep.subr.mxu0 0.0
  %1018 = vmatpush1.msra.mxu0 0.0
  %1019 = vmatprep.subr.mxu0 0.0
  %1020 = vmatpush1.msra.mxu0 0.0
  %1021 = vmatprep.subr.mxu0 0.0
  %1022 = vmatpush1.msra.mxu0 0.0
  %1023 = vmatprep.subr.mxu0 0.0
  %1024 = vmatpush1.msra.mxu0 0.0
  %1025 = vmatprep.subr.mxu0 0.0
  %1026 = vmatpush1.msra.mxu0 0.0
  %1027 = vmatprep.subr.mxu0 0.0
  %1028 = vmatpush1.msra.mxu0 0.0
  %1029 = vmatprep.subr.mxu0 0.0
  %1030 = vmatpush1.msra.mxu0 0.0
  %1031 = vmatprep.subr.mxu0 0.0
  %1032 = vmatpush1.msra.mxu0 0.0
  %1033 = vmatprep.mubr.f32.mxu0 0.0
  %1034 = vmatmul.mubr.f32.gmra.mrb[0].mxu0 %v828
  %v1035 = vpop.f32.mrb[0].mxu0
  %v1036 = vadd.f32 0.0, %v1035
  %v1037 = vpop.f32.mrb[0].mxu0
  %v1038 = vadd.f32 0.0, %v1037
  %1039 = vdwg.mxu0
  %v1040 = vadd.f32 %v830, %v965
  %v1041 = vadd.f32 %v831, %v967
  %v1042 = vadd.f32 %v832, %v1036
  %v1043 = vadd.f32 %v833, %v1038
  %v1044 = vxor.u32 %v1040, 2147483648
  %v1045 = vmul.f32 %v1044, 1.442695
  %v1046 = vpow.pop %v1045
  %v1047 = vadd.f32 %v1046, 1.0
  %v1048 = vrcp.pop %v1047
  %v1049 = vmul.f32 1.0, %v1048
  %v1050 = vxor.u32 %v1041, 2147483648
  %v1051 = vmul.f32 %v1050, 1.442695
  %v1052 = vpow.pop %v1051
  %v1053 = vadd.f32 %v1052, 1.0
  %v1054 = vrcp.pop %v1053
  %v1055 = vmul.f32 1.0, %v1054
  %v1056 = vtanh.pop %v1042
  %v1057 = vxor.u32 %v1043, 2147483648
  %v1058 = vmul.f32 %v1057, 1.442695
  %v1059 = vpow.pop %v1058
  %v1060 = vadd.f32 %v1059, 1.0
  %v1061 = vrcp.pop %v1060
  %v1062 = vmul.f32 1.0, %v1061
  %v1063 = vmul.f32 %v1055, %v826
  %v1064 = vmul.f32 %v1049, %v1056
  %v1065 = vadd.f32 %v1063, %v1064
  %v1066 = vtanh.pop %v1065
  %v1067 = vmul.f32 %v1062, %v1066
  %1068 = vst [vmem:[#allocation3 + $0x10] sm:$0xff] %v1067
  %v1069 = vld [vmem:[#allocation2 + $0x60] sm:$0xff]
  %v1070 = vld [vmem:[#allocation2 + $0x68] sm:$0xff]
  %v1071 = vld [vmem:[#allocation2 + $0x70] sm:$0xff]
  %v1072 = vld [vmem:[#allocation2 + $0x78] sm:$0xff]
  %v1073 = vld [vmem:[%s2] sm:$0xff]
  %v1074 = vld [vmem:[%s2 + $0x8] sm:$0xff]
  %v1075 = vld [vmem:[%s2 + $0x10] sm:$0xff]
  %v1076 = vld [vmem:[%s2 + $0x18] sm:$0xff]
  %v1077 = vld [vmem:[%s2 + $0x20] sm:$0xff]
  %v1078 = vld [vmem:[%s2 + $0x28] sm:$0xff]
  %v1079 = vld [vmem:[%s2 + $0x30] sm:$0xff]
  %v1080 = vld [vmem:[%s2 + $0x38] sm:$0xff]
  %v1081 = vld [vmem:[%s2 + $0x40] sm:$0xff]
  %v1082 = vld [vmem:[%s2 + $0x48] sm:$0xff]
  %v1083 = vld [vmem:[%s2 + $0x50] sm:$0xff]
  %v1084 = vld [vmem:[%s2 + $0x58] sm:$0xff]
  %v1085 = vld [vmem:[%s2 + $0x60] sm:$0xff]
  %v1086 = vld [vmem:[%s2 + $0x68] sm:$0xff]
  %v1087 = vld [vmem:[%s2 + $0x70] sm:$0xff]
  %v1088 = vld [vmem:[%s2 + $0x78] sm:$0xff]
  %v1089 = vld [vmem:[%s2 + $0x80] sm:$0xff]
  %v1090 = vld [vmem:[%s2 + $0x88] sm:$0xff]
  %v1091 = vld [vmem:[%s2 + $0x90] sm:$0xff]
  %v1092 = vld [vmem:[%s2 + $0x98] sm:$0xff]
  %v1093 = vld [vmem:[%s2 + $0xa0] sm:$0xff]
  %v1094 = vld [vmem:[%s2 + $0xa8] sm:$0xff]
  %v1095 = vld [vmem:[%s2 + $0xb0] sm:$0xff]
  %v1096 = vld [vmem:[%s2 + $0xb8] sm:$0xff]
  %v1097 = vld [vmem:[%s2 + $0xc0] sm:$0xff]
  %v1098 = vld [vmem:[%s2 + $0xc8] sm:$0xff]
  %v1099 = vld [vmem:[%s2 + $0xd0] sm:$0xff]
  %v1100 = vld [vmem:[%s2 + $0xd8] sm:$0xff]
  %v1101 = vld [vmem:[%s2 + $0xe0] sm:$0xff]
  %v1102 = vld [vmem:[%s2 + $0xe8] sm:$0xff]
  %v1103 = vld [vmem:[%s2 + $0xf0] sm:$0xff]
  %v1104 = vld [vmem:[%s2 + $0xf8] sm:$0xff]
  %v1105 = vld [vmem:[%s2 + $0x100] sm:$0xff]
  %v1106 = vld [vmem:[%s2 + $0x108] sm:$0xff]
  %v1107 = vld [vmem:[%s2 + $0x110] sm:$0xff]
  %v1108 = vld [vmem:[%s2 + $0x118] sm:$0xff]
  %v1109 = vld [vmem:[%s2 + $0x120] sm:$0xff]
  %v1110 = vld [vmem:[%s2 + $0x128] sm:$0xff]
  %v1111 = vld [vmem:[%s2 + $0x130] sm:$0xff]
  %v1112 = vld [vmem:[%s2 + $0x138] sm:$0xff]
  %v1113 = vld [vmem:[%s2 + $0x140] sm:$0xff]
  %v1114 = vld [vmem:[%s2 + $0x148] sm:$0xff]
  %v1115 = vld [vmem:[%s2 + $0x150] sm:$0xff]
  %v1116 = vld [vmem:[%s2 + $0x158] sm:$0xff]
  %v1117 = vld [vmem:[%s2 + $0x160] sm:$0xff]
  %v1118 = vld [vmem:[%s2 + $0x168] sm:$0xff]
  %v1119 = vld [vmem:[%s2 + $0x170] sm:$0xff]
  %v1120 = vld [vmem:[%s2 + $0x178] sm:$0xff]
  %v1121 = vld [vmem:[%s2 + $0x180] sm:$0xff]
  %v1122 = vld [vmem:[%s2 + $0x188] sm:$0xff]
  %v1123 = vld [vmem:[%s2 + $0x190] sm:$0xff]
  %v1124 = vld [vmem:[%s2 + $0x198] sm:$0xff]
  %v1125 = vld [vmem:[%s2 + $0x1a0] sm:$0xff]
  %v1126 = vld [vmem:[%s2 + $0x1a8] sm:$0xff]
  %v1127 = vld [vmem:[%s2 + $0x1b0] sm:$0xff]
  %v1128 = vld [vmem:[%s2 + $0x1b8] sm:$0xff]
  %v1129 = vld [vmem:[%s2 + $0x1c0] sm:$0xff]
  %v1130 = vld [vmem:[%s2 + $0x1c8] sm:$0xff]
  %v1131 = vld [vmem:[%s2 + $0x1d0] sm:$0xff]
  %v1132 = vld [vmem:[%s2 + $0x1d8] sm:$0xff]
  %v1133 = vld [vmem:[%s2 + $0x1e0] sm:$0xff]
  %v1134 = vld [vmem:[%s2 + $0x1e8] sm:$0xff]
  %v1135 = vld [vmem:[%s2 + $0x1f0] sm:$0xff]
  %v1136 = vld [vmem:[%s2 + $0x1f8] sm:$0xff]
  %1137 = vmatprep.subr.mxu0 %v1074
  %1138 = vmatpush1.msra.mxu0 %v1073
  %1139 = vmatprep.subr.mxu0 %v1078
  %1140 = vmatpush1.msra.mxu0 %v1077
  %1141 = vmatprep.subr.mxu0 %v1082
  %1142 = vmatpush1.msra.mxu0 %v1081
  %1143 = vmatprep.subr.mxu0 %v1086
  %1144 = vmatpush1.msra.mxu0 %v1085
  %1145 = vmatprep.subr.mxu0 %v1090
  %1146 = vmatpush1.msra.mxu0 %v1089
  %1147 = vmatprep.subr.mxu0 %v1094
  %1148 = vmatpush1.msra.mxu0 %v1093
  %1149 = vmatprep.subr.mxu0 %v1098
  %1150 = vmatpush1.msra.mxu0 %v1097
  %1151 = vmatprep.subr.mxu0 %v1102
  %1152 = vmatpush1.msra.mxu0 %v1101
  %1153 = vmatprep.subr.mxu0 %v1106
  %1154 = vmatpush1.msra.mxu0 %v1105
  %1155 = vmatprep.subr.mxu0 %v1110
  %1156 = vmatpush1.msra.mxu0 %v1109
  %1157 = vmatprep.subr.mxu0 %v1114
  %1158 = vmatpush1.msra.mxu0 %v1113
  %1159 = vmatprep.subr.mxu0 %v1118
  %1160 = vmatpush1.msra.mxu0 %v1117
  %1161 = vmatprep.subr.mxu0 %v1122
  %1162 = vmatpush1.msra.mxu0 %v1121
  %1163 = vmatprep.subr.mxu0 %v1126
  %1164 = vmatpush1.msra.mxu0 %v1125
  %1165 = vmatprep.subr.mxu0 %v1130
  %1166 = vmatpush1.msra.mxu0 %v1129
  %1167 = vmatprep.subr.mxu0 %v1134
  %1168 = vmatpush1.msra.mxu0 %v1133
  %1169 = vmatprep.subr.mxu0 0.0
  %1170 = vmatpush1.msra.mxu0 0.0
  %1171 = vmatprep.subr.mxu0 0.0
  %1172 = vmatpush1.msra.mxu0 0.0
  %1173 = vmatprep.subr.mxu0 0.0
  %1174 = vmatpush1.msra.mxu0 0.0
  %1175 = vmatprep.subr.mxu0 0.0
  %1176 = vmatpush1.msra.mxu0 0.0
  %1177 = vmatprep.subr.mxu0 0.0
  %1178 = vmatpush1.msra.mxu0 0.0
  %1179 = vmatprep.subr.mxu0 0.0
  %1180 = vmatpush1.msra.mxu0 0.0
  %1181 = vmatprep.subr.mxu0 0.0
  %1182 = vmatpush1.msra.mxu0 0.0
  %1183 = vmatprep.subr.mxu0 0.0
  %1184 = vmatpush1.msra.mxu0 0.0
  %1185 = vmatprep.subr.mxu0 0.0
  %1186 = vmatpush1.msra.mxu0 0.0
  %1187 = vmatprep.subr.mxu0 0.0
  %1188 = vmatpush1.msra.mxu0 0.0
  %1189 = vmatprep.subr.mxu0 0.0
  %1190 = vmatpush1.msra.mxu0 0.0
  %1191 = vmatprep.subr.mxu0 0.0
  %1192 = vmatpush1.msra.mxu0 0.0
  %1193 = vmatprep.subr.mxu0 0.0
  %1194 = vmatpush1.msra.mxu0 0.0
  %1195 = vmatprep.subr.mxu0 0.0
  %1196 = vmatpush1.msra.mxu0 0.0
  %1197 = vmatprep.subr.mxu0 0.0
  %1198 = vmatpush1.msra.mxu0 0.0
  %1199 = vmatprep.subr.mxu0 0.0
  %1200 = vmatpush1.msra.mxu0 0.0
  %1201 = vmatprep.mubr.f32.mxu0 0.0
  %1202 = vmatmul.mubr.f32.gmra.mrb[0].mxu0 %v1067
  %v1203 = vpop.f32.mrb[0].mxu0
  %v1204 = vadd.f32 0.0, %v1203
  %v1205 = vpop.f32.mrb[0].mxu0
  %v1206 = vadd.f32 0.0, %v1205
  %1207 = vdwg.mxu0
  %1208 = vmatprep.subr.mxu0 %v1076
  %1209 = vmatpush1.msra.mxu0 %v1075
  %1210 = vmatprep.subr.mxu0 %v1080
  %1211 = vmatpush1.msra.mxu0 %v1079
  %1212 = vmatprep.subr.mxu0 %v1084
  %1213 = vmatpush1.msra.mxu0 %v1083
  %1214 = vmatprep.subr.mxu0 %v1088
  %1215 = vmatpush1.msra.mxu0 %v1087
  %1216 = vmatprep.subr.mxu0 %v1092
  %1217 = vmatpush1.msra.mxu0 %v1091
  %1218 = vmatprep.subr.mxu0 %v1096
  %1219 = vmatpush1.msra.mxu0 %v1095
  %1220 = vmatprep.subr.mxu0 %v1100
  %1221 = vmatpush1.msra.mxu0 %v1099
  %1222 = vmatprep.subr.mxu0 %v1104
  %1223 = vmatpush1.msra.mxu0 %v1103
  %1224 = vmatprep.subr.mxu0 %v1108
  %1225 = vmatpush1.msra.mxu0 %v1107
  %1226 = vmatprep.subr.mxu0 %v1112
  %1227 = vmatpush1.msra.mxu0 %v1111
  %1228 = vmatprep.subr.mxu0 %v1116
  %1229 = vmatpush1.msra.mxu0 %v1115
  %1230 = vmatprep.subr.mxu0 %v1120
  %1231 = vmatpush1.msra.mxu0 %v1119
  %1232 = vmatprep.subr.mxu0 %v1124
  %1233 = vmatpush1.msra.mxu0 %v1123
  %1234 = vmatprep.subr.mxu0 %v1128
  %1235 = vmatpush1.msra.mxu0 %v1127
  %1236 = vmatprep.subr.mxu0 %v1132
  %1237 = vmatpush1.msra.mxu0 %v1131
  %1238 = vmatprep.subr.mxu0 %v1136
  %1239 = vmatpush1.msra.mxu0 %v1135
  %1240 = vmatprep.subr.mxu0 0.0
  %1241 = vmatpush1.msra.mxu0 0.0
  %1242 = vmatprep.subr.mxu0 0.0
  %1243 = vmatpush1.msra.mxu0 0.0
  %1244 = vmatprep.subr.mxu0 0.0
  %1245 = vmatpush1.msra.mxu0 0.0
  %1246 = vmatprep.subr.mxu0 0.0
  %1247 = vmatpush1.msra.mxu0 0.0
  %1248 = vmatprep.subr.mxu0 0.0
  %1249 = vmatpush1.msra.mxu0 0.0
  %1250 = vmatprep.subr.mxu0 0.0
  %1251 = vmatpush1.msra.mxu0 0.0
  %1252 = vmatprep.subr.mxu0 0.0
  %1253 = vmatpush1.msra.mxu0 0.0
  %1254 = vmatprep.subr.mxu0 0.0
  %1255 = vmatpush1.msra.mxu0 0.0
  %1256 = vmatprep.subr.mxu0 0.0
  %1257 = vmatpush1.msra.mxu0 0.0
  %1258 = vmatprep.subr.mxu0 0.0
  %1259 = vmatpush1.msra.mxu0 0.0
  %1260 = vmatprep.subr.mxu0 0.0
  %1261 = vmatpush1.msra.mxu0 0.0
  %1262 = vmatprep.subr.mxu0 0.0
  %1263 = vmatpush1.msra.mxu0 0.0
  %1264 = vmatprep.subr.mxu0 0.0
  %1265 = vmatpush1.msra.mxu0 0.0
  %1266 = vmatprep.subr.mxu0 0.0
  %1267 = vmatpush1.msra.mxu0 0.0
  %1268 = vmatprep.subr.mxu0 0.0
  %1269 = vmatpush1.msra.mxu0 0.0
  %1270 = vmatprep.subr.mxu0 0.0
  %1271 = vmatpush1.msra.mxu0 0.0
  %1272 = vmatprep.mubr.f32.mxu0 0.0
  %1273 = vmatmul.mubr.f32.gmra.mrb[0].mxu0 %v1067
  %v1274 = vpop.f32.mrb[0].mxu0
  %v1275 = vadd.f32 0.0, %v1274
  %v1276 = vpop.f32.mrb[0].mxu0
  %v1277 = vadd.f32 0.0, %v1276
  %1278 = vdwg.mxu0
  %v1279 = vadd.f32 %v1069, %v1204
  %v1280 = vadd.f32 %v1070, %v1206
  %v1281 = vadd.f32 %v1071, %v1275
  %v1282 = vadd.f32 %v1072, %v1277
  %v1283 = vxor.u32 %v1279, 2147483648
  %v1284 = vmul.f32 %v1283, 1.442695
  %v1285 = vpow.pop %v1284
  %v1286 = vadd.f32 %v1285, 1.0
  %v1287 = vrcp.pop %v1286
  %v1288 = vmul.f32 1.0, %v1287
  %v1289 = vxor.u32 %v1280, 2147483648
  %v1290 = vmul.f32 %v1289, 1.442695
  %v1291 = vpow.pop %v1290
  %v1292 = vadd.f32 %v1291, 1.0
  %v1293 = vrcp.pop %v1292
  %v1294 = vmul.f32 1.0, %v1293
  %v1295 = vtanh.pop %v1281
  %v1296 = vxor.u32 %v1282, 2147483648
  %v1297 = vmul.f32 %v1296, 1.442695
  %v1298 = vpow.pop %v1297
  %v1299 = vadd.f32 %v1298, 1.0
  %v1300 = vrcp.pop %v1299
  %v1301 = vmul.f32 1.0, %v1300
  %v1302 = vmul.f32 %v1294, %v1065
  %v1303 = vmul.f32 %v1288, %v1295
  %v1304 = vadd.f32 %v1302, %v1303
  %v1305 = vtanh.pop %v1304
  %v1306 = vmul.f32 %v1301, %v1305
  %1307 = vst [vmem:[#allocation3 + $0x18] sm:$0xff] %v1306
  %v1308 = vld [vmem:[#allocation2 + $0x80] sm:$0xff]
  %v1309 = vld [vmem:[#allocation2 + $0x88] sm:$0xff]
  %v1310 = vld [vmem:[#allocation2 + $0x90] sm:$0xff]
  %v1311 = vld [vmem:[#allocation2 + $0x98] sm:$0xff]
  %v1312 = vld [vmem:[%s2] sm:$0xff]
  %v1313 = vld [vmem:[%s2 + $0x8] sm:$0xff]
  %v1314 = vld [vmem:[%s2 + $0x10] sm:$0xff]
  %v1315 = vld [vmem:[%s2 + $0x18] sm:$0xff]
  %v1316 = vld [vmem:[%s2 + $0x20] sm:$0xff]
  %v1317 = vld [vmem:[%s2 + $0x28] sm:$0xff]
  %v1318 = vld [vmem:[%s2 + $0x30] sm:$0xff]
  %v1319 = vld [vmem:[%s2 + $0x38] sm:$0xff]
  %v1320 = vld [vmem:[%s2 + $0x40] sm:$0xff]
  %v1321 = vld [vmem:[%s2 + $0x48] sm:$0xff]
  %v1322 = vld [vmem:[%s2 + $0x50] sm:$0xff]
  %v1323 = vld [vmem:[%s2 + $0x58] sm:$0xff]
  %v1324 = vld [vmem:[%s2 + $0x60] sm:$0xff]
  %v1325 = vld [vmem:[%s2 + $0x68] sm:$0xff]
  %v1326 = vld [vmem:[%s2 + $0x70] sm:$0xff]
  %v1327 = vld [vmem:[%s2 + $0x78] sm:$0xff]
  %v1328 = vld [vmem:[%s2 + $0x80] sm:$0xff]
  %v1329 = vld [vmem:[%s2 + $0x88] sm:$0xff]
  %v1330 = vld [vmem:[%s2 + $0x90] sm:$0xff]
  %v1331 = vld [vmem:[%s2 + $0x98] sm:$0xff]
  %v1332 = vld [vmem:[%s2 + $0xa0] sm:$0xff]
  %v1333 = vld [vmem:[%s2 + $0xa8] sm:$0xff]
  %v1334 = vld [vmem:[%s2 + $0xb0] sm:$0xff]
  %v1335 = vld [vmem:[%s2 + $0xb8] sm:$0xff]
  %v1336 = vld [vmem:[%s2 + $0xc0] sm:$0xff]
  %v1337 = vld [vmem:[%s2 + $0xc8] sm:$0xff]
  %v1338 = vld [vmem:[%s2 + $0xd0] sm:$0xff]
  %v1339 = vld [vmem:[%s2 + $0xd8] sm:$0xff]
  %v1340 = vld [vmem:[%s2 + $0xe0] sm:$0xff]
  %v1341 = vld [vmem:[%s2 + $0xe8] sm:$0xff]
  %v1342 = vld [vmem:[%s2 + $0xf0] sm:$0xff]
  %v1343 = vld [vmem:[%s2 + $0xf8] sm:$0xff]
  %v1344 = vld [vmem:[%s2 + $0x100] sm:$0xff]
  %v1345 = vld [vmem:[%s2 + $0x108] sm:$0xff]
  %v1346 = vld [vmem:[%s2 + $0x110] sm:$0xff]
  %v1347 = vld [vmem:[%s2 + $0x118] sm:$0xff]
  %v1348 = vld [vmem:[%s2 + $0x120] sm:$0xff]
  %v1349 = vld [vmem:[%s2 + $0x128] sm:$0xff]
  %v1350 = vld [vmem:[%s2 + $0x130] sm:$0xff]
  %v1351 = vld [vmem:[%s2 + $0x138] sm:$0xff]
  %v1352 = vld [vmem:[%s2 + $0x140] sm:$0xff]
  %v1353 = vld [vmem:[%s2 + $0x148] sm:$0xff]
  %v1354 = vld [vmem:[%s2 + $0x150] sm:$0xff]
  %v1355 = vld [vmem:[%s2 + $0x158] sm:$0xff]
  %v1356 = vld [vmem:[%s2 + $0x160] sm:$0xff]
  %v1357 = vld [vmem:[%s2 + $0x168] sm:$0xff]
  %v1358 = vld [vmem:[%s2 + $0x170] sm:$0xff]
  %v1359 = vld [vmem:[%s2 + $0x178] sm:$0xff]
  %v1360 = vld [vmem:[%s2 + $0x180] sm:$0xff]
  %v1361 = vld [vmem:[%s2 + $0x188] sm:$0xff]
  %v1362 = vld [vmem:[%s2 + $0x190] sm:$0xff]
  %v1363 = vld [vmem:[%s2 + $0x198] sm:$0xff]
  %v1364 = vld [vmem:[%s2 + $0x1a0] sm:$0xff]
  %v1365 = vld [vmem:[%s2 + $0x1a8] sm:$0xff]
  %v1366 = vld [vmem:[%s2 + $0x1b0] sm:$0xff]
  %v1367 = vld [vmem:[%s2 + $0x1b8] sm:$0xff]
  %v1368 = vld [vmem:[%s2 + $0x1c0] sm:$0xff]
  %v1369 = vld [vmem:[%s2 + $0x1c8] sm:$0xff]
  %v1370 = vld [vmem:[%s2 + $0x1d0] sm:$0xff]
  %v1371 = vld [vmem:[%s2 + $0x1d8] sm:$0xff]
  %v1372 = vld [vmem:[%s2 + $0x1e0] sm:$0xff]
  %v1373 = vld [vmem:[%s2 + $0x1e8] sm:$0xff]
  %v1374 = vld [vmem:[%s2 + $0x1f0] sm:$0xff]
  %v1375 = vld [vmem:[%s2 + $0x1f8] sm:$0xff]
  %1376 = vmatprep.subr.mxu0 %v1313
  %1377 = vmatpush1.msra.mxu0 %v1312
  %1378 = vmatprep.subr.mxu0 %v1317
  %1379 = vmatpush1.msra.mxu0 %v1316
  %1380 = vmatprep.subr.mxu0 %v1321
  %1381 = vmatpush1.msra.mxu0 %v1320
  %1382 = vmatprep.subr.mxu0 %v1325
  %1383 = vmatpush1.msra.mxu0 %v1324
  %1384 = vmatprep.subr.mxu0 %v1329
  %1385 = vmatpush1.msra.mxu0 %v1328
  %1386 = vmatprep.subr.mxu0 %v1333
  %1387 = vmatpush1.msra.mxu0 %v1332
  %1388 = vmatprep.subr.mxu0 %v1337
  %1389 = vmatpush1.msra.mxu0 %v1336
  %1390 = vmatprep.subr.mxu0 %v1341
  %1391 = vmatpush1.msra.mxu0 %v1340
  %1392 = vmatprep.subr.mxu0 %v1345
  %1393 = vmatpush1.msra.mxu0 %v1344
  %1394 = vmatprep.subr.mxu0 %v1349
  %1395 = vmatpush1.msra.mxu0 %v1348
  %1396 = vmatprep.subr.mxu0 %v1353
  %1397 = vmatpush1.msra.mxu0 %v1352
  %1398 = vmatprep.subr.mxu0 %v1357
  %1399 = vmatpush1.msra.mxu0 %v1356
  %1400 = vmatprep.subr.mxu0 %v1361
  %1401 = vmatpush1.msra.mxu0 %v1360
  %1402 = vmatprep.subr.mxu0 %v1365
  %1403 = vmatpush1.msra.mxu0 %v1364
  %1404 = vmatprep.subr.mxu0 %v1369
  %1405 = vmatpush1.msra.mxu0 %v1368
  %1406 = vmatprep.subr.mxu0 %v1373
  %1407 = vmatpush1.msra.mxu0 %v1372
  %1408 = vmatprep.subr.mxu0 0.0
  %1409 = vmatpush1.msra.mxu0 0.0
  %1410 = vmatprep.subr.mxu0 0.0
  %1411 = vmatpush1.msra.mxu0 0.0
  %1412 = vmatprep.subr.mxu0 0.0
  %1413 = vmatpush1.msra.mxu0 0.0
  %1414 = vmatprep.subr.mxu0 0.0
  %1415 = vmatpush1.msra.mxu0 0.0
  %1416 = vmatprep.subr.mxu0 0.0
  %1417 = vmatpush1.msra.mxu0 0.0
  %1418 = vmatprep.subr.mxu0 0.0
  %1419 = vmatpush1.msra.mxu0 0.0
  %1420 = vmatprep.subr.mxu0 0.0
  %1421 = vmatpush1.msra.mxu0 0.0
  %1422 = vmatprep.subr.mxu0 0.0
  %1423 = vmatpush1.msra.mxu0 0.0
  %1424 = vmatprep.subr.mxu0 0.0
  %1425 = vmatpush1.msra.mxu0 0.0
  %1426 = vmatprep.subr.mxu0 0.0
  %1427 = vmatpush1.msra.mxu0 0.0
  %1428 = vmatprep.subr.mxu0 0.0
  %1429 = vmatpush1.msra.mxu0 0.0
  %1430 = vmatprep.subr.mxu0 0.0
  %1431 = vmatpush1.msra.mxu0 0.0
  %1432 = vmatprep.subr.mxu0 0.0
  %1433 = vmatpush1.msra.mxu0 0.0
  %1434 = vmatprep.subr.mxu0 0.0
  %1435 = vmatpush1.msra.mxu0 0.0
  %1436 = vmatprep.subr.mxu0 0.0
  %1437 = vmatpush1.msra.mxu0 0.0
  %1438 = vmatprep.subr.mxu0 0.0
  %1439 = vmatpush1.msra.mxu0 0.0
  %1440 = vmatprep.mubr.f32.mxu0 0.0
  %1441 = vmatmul.mubr.f32.gmra.mrb[0].mxu0 %v1306
  %v1442 = vpop.f32.mrb[0].mxu0
  %v1443 = vadd.f32 0.0, %v1442
  %v1444 = vpop.f32.mrb[0].mxu0
  %v1445 = vadd.f32 0.0, %v1444
  %1446 = vdwg.mxu0
  %1447 = vmatprep.subr.mxu0 %v1315
  %1448 = vmatpush1.msra.mxu0 %v1314
  %1449 = vmatprep.subr.mxu0 %v1319
  %1450 = vmatpush1.msra.mxu0 %v1318
  %1451 = vmatprep.subr.mxu0 %v1323
  %1452 = vmatpush1.msra.mxu0 %v1322
  %1453 = vmatprep.subr.mxu0 %v1327
  %1454 = vmatpush1.msra.mxu0 %v1326
  %1455 = vmatprep.subr.mxu0 %v1331
  %1456 = vmatpush1.msra.mxu0 %v1330
  %1457 = vmatprep.subr.mxu0 %v1335
  %1458 = vmatpush1.msra.mxu0 %v1334
  %1459 = vmatprep.subr.mxu0 %v1339
  %1460 = vmatpush1.msra.mxu0 %v1338
  %1461 = vmatprep.subr.mxu0 %v1343
  %1462 = vmatpush1.msra.mxu0 %v1342
  %1463 = vmatprep.subr.mxu0 %v1347
  %1464 = vmatpush1.msra.mxu0 %v1346
  %1465 = vmatprep.subr.mxu0 %v1351
  %1466 = vmatpush1.msra.mxu0 %v1350
  %1467 = vmatprep.subr.mxu0 %v1355
  %1468 = vmatpush1.msra.mxu0 %v1354
  %1469 = vmatprep.subr.mxu0 %v1359
  %1470 = vmatpush1.msra.mxu0 %v1358
  %1471 = vmatprep.subr.mxu0 %v1363
  %1472 = vmatpush1.msra.mxu0 %v1362
  %1473 = vmatprep.subr.mxu0 %v1367
  %1474 = vmatpush1.msra.mxu0 %v1366
  %1475 = vmatprep.subr.mxu0 %v1371
  %1476 = vmatpush1.msra.mxu0 %v1370
  %1477 = vmatprep.subr.mxu0 %v1375
  %1478 = vmatpush1.msra.mxu0 %v1374
  %1479 = vmatprep.subr.mxu0 0.0
  %1480 = vmatpush1.msra.mxu0 0.0
  %1481 = vmatprep.subr.mxu0 0.0
  %1482 = vmatpush1.msra.mxu0 0.0
  %1483 = vmatprep.subr.mxu0 0.0
  %1484 = vmatpush1.msra.mxu0 0.0
  %1485 = vmatprep.subr.mxu0 0.0
  %1486 = vmatpush1.msra.mxu0 0.0
  %1487 = vmatprep.subr.mxu0 0.0
  %1488 = vmatpush1.msra.mxu0 0.0
  %1489 = vmatprep.subr.mxu0 0.0
  %1490 = vmatpush1.msra.mxu0 0.0
  %1491 = vmatprep.subr.mxu0 0.0
  %1492 = vmatpush1.msra.mxu0 0.0
  %1493 = vmatprep.subr.mxu0 0.0
  %1494 = vmatpush1.msra.mxu0 0.0
  %1495 = vmatprep.subr.mxu0 0.0
  %1496 = vmatpush1.msra.mxu0 0.0
  %1497 = vmatprep.subr.mxu0 0.0
  %1498 = vmatpush1.msra.mxu0 0.0
  %1499 = vmatprep.subr.mxu0 0.0
  %1500 = vmatpush1.msra.mxu0 0.0
  %1501 = vmatprep.subr.mxu0 0.0
  %1502 = vmatpush1.msra.mxu0 0.0
  %1503 = vmatprep.subr.mxu0 0.0
  %1504 = vmatpush1.msra.mxu0 0.0
  %1505 = vmatprep.subr.mxu0 0.0
  %1506 = vmatpush1.msra.mxu0 0.0
  %1507 = vmatprep.subr.mxu0 0.0
  %1508 = vmatpush1.msra.mxu0 0.0
  %1509 = vmatprep.subr.mxu0 0.0
  %1510 = vmatpush1.msra.mxu0 0.0
  %1511 = vmatprep.mubr.f32.mxu0 0.0
  %1512 = vmatmul.mubr.f32.gmra.mrb[0].mxu0 %v1306
  %v1513 = vpop.f32.mrb[0].mxu0
  %v1514 = vadd.f32 0.0, %v1513
  %v1515 = vpop.f32.mrb[0].mxu0
  %v1516 = vadd.f32 0.0, %v1515
  %1517 = vdwg.mxu0
  %v1518 = vadd.f32 %v1308, %v1443
  %v1519 = vadd.f32 %v1309, %v1445
  %v1520 = vadd.f32 %v1310, %v1514
  %v1521 = vadd.f32 %v1311, %v1516
  %v1522 = vxor.u32 %v1518, 2147483648
  %v1523 = vmul.f32 %v1522, 1.442695
  %v1524 = vpow.pop %v1523
  %v1525 = vadd.f32 %v1524, 1.0
  %v1526 = vrcp.pop %v1525
  %v1527 = vmul.f32 1.0, %v1526
  %v1528 = vxor.u32 %v1519, 2147483648
  %v1529 = vmul.f32 %v1528, 1.442695
  %v1530 = vpow.pop %v1529
  %v1531 = vadd.f32 %v1530, 1.0
  %v1532 = vrcp.pop %v1531
  %v1533 = vmul.f32 1.0, %v1532
  %v1534 = vtanh.pop %v1520
  %v1535 = vxor.u32 %v1521, 2147483648
  %v1536 = vmul.f32 %v1535, 1.442695
  %v1537 = vpow.pop %v1536
  %v1538 = vadd.f32 %v1537, 1.0
  %v1539 = vrcp.pop %v1538
  %v1540 = vmul.f32 1.0, %v1539
  %v1541 = vmul.f32 %v1533, %v1304
  %v1542 = vmul.f32 %v1527, %v1534
  %v1543 = vadd.f32 %v1541, %v1542
  %v1544 = vtanh.pop %v1543
  %v1545 = vmul.f32 %v1540, %v1544
  %1546 = vst [vmem:[#allocation3 + $0x20] sm:$0xff] %v1545
  %v1547 = vld [vmem:[#allocation2 + $0xa0] sm:$0xff]
  %v1548 = vld [vmem:[#allocation2 + $0xa8] sm:$0xff]
  %v1549 = vld [vmem:[#allocation2 + $0xb0] sm:$0xff]
  %v1550 = vld [vmem:[#allocation2 + $0xb8] sm:$0xff]
  %v1551 = vld [vmem:[%s2] sm:$0xff]
  %v1552 = vld [vmem:[%s2 + $0x8] sm:$0xff]
  %v1553 = vld [vmem:[%s2 + $0x10] sm:$0xff]
  %v1554 = vld [vmem:[%s2 + $0x18] sm:$0xff]
  %v1555 = vld [vmem:[%s2 + $0x20] sm:$0xff]
  %v1556 = vld [vmem:[%s2 + $0x28] sm:$0xff]
  %v1557 = vld [vmem:[%s2 + $0x30] sm:$0xff]
  %v1558 = vld [vmem:[%s2 + $0x38] sm:$0xff]
  %v1559 = vld [vmem:[%s2 + $0x40] sm:$0xff]
  %v1560 = vld [vmem:[%s2 + $0x48] sm:$0xff]
  %v1561 = vld [vmem:[%s2 + $0x50] sm:$0xff]
  %v1562 = vld [vmem:[%s2 + $0x58] sm:$0xff]
  %v1563 = vld [vmem:[%s2 + $0x60] sm:$0xff]
  %v1564 = vld [vmem:[%s2 + $0x68] sm:$0xff]
  %v1565 = vld [vmem:[%s2 + $0x70] sm:$0xff]
  %v1566 = vld [vmem:[%s2 + $0x78] sm:$0xff]
  %v1567 = vld [vmem:[%s2 + $0x80] sm:$0xff]
  %v1568 = vld [vmem:[%s2 + $0x88] sm:$0xff]
  %v1569 = vld [vmem:[%s2 + $0x90] sm:$0xff]
  %v1570 = vld [vmem:[%s2 + $0x98] sm:$0xff]
  %v1571 = vld [vmem:[%s2 + $0xa0] sm:$0xff]
  %v1572 = vld [vmem:[%s2 + $0xa8] sm:$0xff]
  %v1573 = vld [vmem:[%s2 + $0xb0] sm:$0xff]
  %v1574 = vld [vmem:[%s2 + $0xb8] sm:$0xff]
  %v1575 = vld [vmem:[%s2 + $0xc0] sm:$0xff]
  %v1576 = vld [vmem:[%s2 + $0xc8] sm:$0xff]
  %v1577 = vld [vmem:[%s2 + $0xd0] sm:$0xff]
  %v1578 = vld [vmem:[%s2 + $0xd8] sm:$0xff]
  %v1579 = vld [vmem:[%s2 + $0xe0] sm:$0xff]
  %v1580 = vld [vmem:[%s2 + $0xe8] sm:$0xff]
  %v1581 = vld [vmem:[%s2 + $0xf0] sm:$0xff]
  %v1582 = vld [vmem:[%s2 + $0xf8] sm:$0xff]
  %v1583 = vld [vmem:[%s2 + $0x100] sm:$0xff]
  %v1584 = vld [vmem:[%s2 + $0x108] sm:$0xff]
  %v1585 = vld [vmem:[%s2 + $0x110] sm:$0xff]
  %v1586 = vld [vmem:[%s2 + $0x118] sm:$0xff]
  %v1587 = vld [vmem:[%s2 + $0x120] sm:$0xff]
  %v1588 = vld [vmem:[%s2 + $0x128] sm:$0xff]
  %v1589 = vld [vmem:[%s2 + $0x130] sm:$0xff]
  %v1590 = vld [vmem:[%s2 + $0x138] sm:$0xff]
  %v1591 = vld [vmem:[%s2 + $0x140] sm:$0xff]
  %v1592 = vld [vmem:[%s2 + $0x148] sm:$0xff]
  %v1593 = vld [vmem:[%s2 + $0x150] sm:$0xff]
  %v1594 = vld [vmem:[%s2 + $0x158] sm:$0xff]
  %v1595 = vld [vmem:[%s2 + $0x160] sm:$0xff]
  %v1596 = vld [vmem:[%s2 + $0x168] sm:$0xff]
  %v1597 = vld [vmem:[%s2 + $0x170] sm:$0xff]
  %v1598 = vld [vmem:[%s2 + $0x178] sm:$0xff]
  %v1599 = vld [vmem:[%s2 + $0x180] sm:$0xff]
  %v1600 = vld [vmem:[%s2 + $0x188] sm:$0xff]
  %v1601 = vld [vmem:[%s2 + $0x190] sm:$0xff]
  %v1602 = vld [vmem:[%s2 + $0x198] sm:$0xff]
  %v1603 = vld [vmem:[%s2 + $0x1a0] sm:$0xff]
  %v1604 = vld [vmem:[%s2 + $0x1a8] sm:$0xff]
  %v1605 = vld [vmem:[%s2 + $0x1b0] sm:$0xff]
  %v1606 = vld [vmem:[%s2 + $0x1b8] sm:$0xff]
  %v1607 = vld [vmem:[%s2 + $0x1c0] sm:$0xff]
  %v1608 = vld [vmem:[%s2 + $0x1c8] sm:$0xff]
  %v1609 = vld [vmem:[%s2 + $0x1d0] sm:$0xff]
  %v1610 = vld [vmem:[%s2 + $0x1d8] sm:$0xff]
  %v1611 = vld [vmem:[%s2 + $0x1e0] sm:$0xff]
  %v1612 = vld [vmem:[%s2 + $0x1e8] sm:$0xff]
  %v1613 = vld [vmem:[%s2 + $0x1f0] sm:$0xff]
  %v1614 = vld [vmem:[%s2 + $0x1f8] sm:$0xff]
  %1615 = vmatprep.subr.mxu0 %v1552
  %1616 = vmatpush1.msra.mxu0 %v1551
  %1617 = vmatprep.subr.mxu0 %v1556
  %1618 = vmatpush1.msra.mxu0 %v1555
  %1619 = vmatprep.subr.mxu0 %v1560
  %1620 = vmatpush1.msra.mxu0 %v1559
  %1621 = vmatprep.subr.mxu0 %v1564
  %1622 = vmatpush1.msra.mxu0 %v1563
  %1623 = vmatprep.subr.mxu0 %v1568
  %1624 = vmatpush1.msra.mxu0 %v1567
  %1625 = vmatprep.subr.mxu0 %v1572
  %1626 = vmatpush1.msra.mxu0 %v1571
  %1627 = vmatprep.subr.mxu0 %v1576
  %1628 = vmatpush1.msra.mxu0 %v1575
  %1629 = vmatprep.subr.mxu0 %v1580
  %1630 = vmatpush1.msra.mxu0 %v1579
  %1631 = vmatprep.subr.mxu0 %v1584
  %1632 = vmatpush1.msra.mxu0 %v1583
  %1633 = vmatprep.subr.mxu0 %v1588
  %1634 = vmatpush1.msra.mxu0 %v1587
  %1635 = vmatprep.subr.mxu0 %v1592
  %1636 = vmatpush1.msra.mxu0 %v1591
  %1637 = vmatprep.subr.mxu0 %v1596
  %1638 = vmatpush1.msra.mxu0 %v1595
  %1639 = vmatprep.subr.mxu0 %v1600
  %1640 = vmatpush1.msra.mxu0 %v1599
  %1641 = vmatprep.subr.mxu0 %v1604
  %1642 = vmatpush1.msra.mxu0 %v1603
  %1643 = vmatprep.subr.mxu0 %v1608
  %1644 = vmatpush1.msra.mxu0 %v1607
  %1645 = vmatprep.subr.mxu0 %v1612
  %1646 = vmatpush1.msra.mxu0 %v1611
  %1647 = vmatprep.subr.mxu0 0.0
  %1648 = vmatpush1.msra.mxu0 0.0
  %1649 = vmatprep.subr.mxu0 0.0
  %1650 = vmatpush1.msra.mxu0 0.0
  %1651 = vmatprep.subr.mxu0 0.0
  %1652 = vmatpush1.msra.mxu0 0.0
  %1653 = vmatprep.subr.mxu0 0.0
  %1654 = vmatpush1.msra.mxu0 0.0
  %1655 = vmatprep.subr.mxu0 0.0
  %1656 = vmatpush1.msra.mxu0 0.0
  %1657 = vmatprep.subr.mxu0 0.0
  %1658 = vmatpush1.msra.mxu0 0.0
  %1659 = vmatprep.subr.mxu0 0.0
  %1660 = vmatpush1.msra.mxu0 0.0
  %1661 = vmatprep.subr.mxu0 0.0
  %1662 = vmatpush1.msra.mxu0 0.0
  %1663 = vmatprep.subr.mxu0 0.0
  %1664 = vmatpush1.msra.mxu0 0.0
  %1665 = vmatprep.subr.mxu0 0.0
  %1666 = vmatpush1.msra.mxu0 0.0
  %1667 = vmatprep.subr.mxu0 0.0
  %1668 = vmatpush1.msra.mxu0 0.0
  %1669 = vmatprep.subr.mxu0 0.0
  %1670 = vmatpush1.msra.mxu0 0.0
  %1671 = vmatprep.subr.mxu0 0.0
  %1672 = vmatpush1.msra.mxu0 0.0
  %1673 = vmatprep.subr.mxu0 0.0
  %1674 = vmatpush1.msra.mxu0 0.0
  %1675 = vmatprep.subr.mxu0 0.0
  %1676 = vmatpush1.msra.mxu0 0.0
  %1677 = vmatprep.subr.mxu0 0.0
  %1678 = vmatpush1.msra.mxu0 0.0
  %1679 = vmatprep.mubr.f32.mxu0 0.0
  %1680 = vmatmul.mubr.f32.gmra.mrb[0].mxu0 %v1545
  %v1681 = vpop.f32.mrb[0].mxu0
  %v1682 = vadd.f32 0.0, %v1681
  %v1683 = vpop.f32.mrb[0].mxu0
  %v1684 = vadd.f32 0.0, %v1683
  %1685 = vdwg.mxu0
  %1686 = vmatprep.subr.mxu0 %v1554
  %1687 = vmatpush1.msra.mxu0 %v1553
  %1688 = vmatprep.subr.mxu0 %v1558
  %1689 = vmatpush1.msra.mxu0 %v1557
  %1690 = vmatprep.subr.mxu0 %v1562
  %1691 = vmatpush1.msra.mxu0 %v1561
  %1692 = vmatprep.subr.mxu0 %v1566
  %1693 = vmatpush1.msra.mxu0 %v1565
  %1694 = vmatprep.subr.mxu0 %v1570
  %1695 = vmatpush1.msra.mxu0 %v1569
  %1696 = vmatprep.subr.mxu0 %v1574
  %1697 = vmatpush1.msra.mxu0 %v1573
  %1698 = vmatprep.subr.mxu0 %v1578
  %1699 = vmatpush1.msra.mxu0 %v1577
  %1700 = vmatprep.subr.mxu0 %v1582
  %1701 = vmatpush1.msra.mxu0 %v1581
  %1702 = vmatprep.subr.mxu0 %v1586
  %1703 = vmatpush1.msra.mxu0 %v1585
  %1704 = vmatprep.subr.mxu0 %v1590
  %1705 = vmatpush1.msra.mxu0 %v1589
  %1706 = vmatprep.subr.mxu0 %v1594
  %1707 = vmatpush1.msra.mxu0 %v1593
  %1708 = vmatprep.subr.mxu0 %v1598
  %1709 = vmatpush1.msra.mxu0 %v1597
  %1710 = vmatprep.subr.mxu0 %v1602
  %1711 = vmatpush1.msra.mxu0 %v1601
  %1712 = vmatprep.subr.mxu0 %v1606
  %1713 = vmatpush1.msra.mxu0 %v1605
  %1714 = vmatprep.subr.mxu0 %v1610
  %1715 = vmatpush1.msra.mxu0 %v1609
  %1716 = vmatprep.subr.mxu0 %v1614
  %1717 = vmatpush1.msra.mxu0 %v1613
  %1718 = vmatprep.subr.mxu0 0.0
  %1719 = vmatpush1.msra.mxu0 0.0
  %1720 = vmatprep.subr.mxu0 0.0
  %1721 = vmatpush1.msra.mxu0 0.0
  %1722 = vmatprep.subr.mxu0 0.0
  %1723 = vmatpush1.msra.mxu0 0.0
  %1724 = vmatprep.subr.mxu0 0.0
  %1725 = vmatpush1.msra.mxu0 0.0
  %1726 = vmatprep.subr.mxu0 0.0
  %1727 = vmatpush1.msra.mxu0 0.0
  %1728 = vmatprep.subr.mxu0 0.0
  %1729 = vmatpush1.msra.mxu0 0.0
  %1730 = vmatprep.subr.mxu0 0.0
  %1731 = vmatpush1.msra.mxu0 0.0
  %1732 = vmatprep.subr.mxu0 0.0
  %1733 = vmatpush1.msra.mxu0 0.0
  %1734 = vmatprep.subr.mxu0 0.0
  %1735 = vmatpush1.msra.mxu0 0.0
  %1736 = vmatprep.subr.mxu0 0.0
  %1737 = vmatpush1.msra.mxu0 0.0
  %1738 = vmatprep.subr.mxu0 0.0
  %1739 = vmatpush1.msra.mxu0 0.0
  %1740 = vmatprep.subr.mxu0 0.0
  %1741 = vmatpush1.msra.mxu0 0.0
  %1742 = vmatprep.subr.mxu0 0.0
  %1743 = vmatpush1.msra.mxu0 0.0
  %1744 = vmatprep.subr.mxu0 0.0
  %1745 = vmatpush1.msra.mxu0 0.0
  %1746 = vmatprep.subr.mxu0 0.0
  %1747 = vmatpush1.msra.mxu0 0.0
  %1748 = vmatprep.subr.mxu0 0.0
  %1749 = vmatpush1.msra.mxu0 0.0
  %1750 = vmatprep.mubr.f32.mxu0 0.0
  %1751 = vmatmul.mubr.f32.gmra.mrb[0].mxu0 %v1545
  %v1752 = vpop.f32.mrb[0].mxu0
  %v1753 = vadd.f32 0.0, %v1752
  %v1754 = vpop.f32.mrb[0].mxu0
  %v1755 = vadd.f32 0.0, %v1754
  %1756 = vdwg.mxu0
  %v1757 = vadd.f32 %v1547, %v1682
  %v1758 = vadd.f32 %v1548, %v1684
  %v1759 = vadd.f32 %v1549, %v1753
  %v1760 = vadd.f32 %v1550, %v1755
  %v1761 = vxor.u32 %v1757, 2147483648
  %v1762 = vmul.f32 %v1761, 1.442695
  %v1763 = vpow.pop %v1762
  %v1764 = vadd.f32 %v1763, 1.0
  %v1765 = vrcp.pop %v1764
  %v1766 = vmul.f32 1.0, %v1765
  %v1767 = vxor.u32 %v1758, 2147483648
  %v1768 = vmul.f32 %v1767, 1.442695
  %v1769 = vpow.pop %v1768
  %v1770 = vadd.f32 %v1769, 1.0
  %v1771 = vrcp.pop %v1770
  %v1772 = vmul.f32 1.0, %v1771
  %v1773 = vtanh.pop %v1759
  %v1774 = vxor.u32 %v1760, 2147483648
  %v1775 = vmul.f32 %v1774, 1.442695
  %v1776 = vpow.pop %v1775
  %v1777 = vadd.f32 %v1776, 1.0
  %v1778 = vrcp.pop %v1777
  %v1779 = vmul.f32 1.0, %v1778
  %v1780 = vmul.f32 %v1772, %v1543
  %v1781 = vmul.f32 %v1766, %v1773
  %v1782 = vadd.f32 %v1780, %v1781
  %v1783 = vtanh.pop %v1782
  %v1784 = vmul.f32 %v1779, %v1783
  %1785 = vst [vmem:[#allocation3 + $0x28] sm:$0xff] %v1784
  %v1786 = vld [vmem:[#allocation2 + $0xc0] sm:$0xff]
  %v1787 = vld [vmem:[#allocation2 + $0xc8] sm:$0xff]
  %v1788 = vld [vmem:[#allocation2 + $0xd0] sm:$0xff]
  %v1789 = vld [vmem:[#allocation2 + $0xd8] sm:$0xff]
  %v1790 = vld [vmem:[%s2] sm:$0xff]
  %v1791 = vld [vmem:[%s2 + $0x8] sm:$0xff]
  %v1792 = vld [vmem:[%s2 + $0x10] sm:$0xff]
  %v1793 = vld [vmem:[%s2 + $0x18] sm:$0xff]
  %v1794 = vld [vmem:[%s2 + $0x20] sm:$0xff]
  %v1795 = vld [vmem:[%s2 + $0x28] sm:$0xff]
  %v1796 = vld [vmem:[%s2 + $0x30] sm:$0xff]
  %v1797 = vld [vmem:[%s2 + $0x38] sm:$0xff]
  %v1798 = vld [vmem:[%s2 + $0x40] sm:$0xff]
  %v1799 = vld [vmem:[%s2 + $0x48] sm:$0xff]
  %v1800 = vld [vmem:[%s2 + $0x50] sm:$0xff]
  %v1801 = vld [vmem:[%s2 + $0x58] sm:$0xff]
  %v1802 = vld [vmem:[%s2 + $0x60] sm:$0xff]
  %v1803 = vld [vmem:[%s2 + $0x68] sm:$0xff]
  %v1804 = vld [vmem:[%s2 + $0x70] sm:$0xff]
  %v1805 = vld [vmem:[%s2 + $0x78] sm:$0xff]
  %v1806 = vld [vmem:[%s2 + $0x80] sm:$0xff]
  %v1807 = vld [vmem:[%s2 + $0x88] sm:$0xff]
  %v1808 = vld [vmem:[%s2 + $0x90] sm:$0xff]
  %v1809 = vld [vmem:[%s2 + $0x98] sm:$0xff]
  %v1810 = vld [vmem:[%s2 + $0xa0] sm:$0xff]
  %v1811 = vld [vmem:[%s2 + $0xa8] sm:$0xff]
  %v1812 = vld [vmem:[%s2 + $0xb0] sm:$0xff]
  %v1813 = vld [vmem:[%s2 + $0xb8] sm:$0xff]
  %v1814 = vld [vmem:[%s2 + $0xc0] sm:$0xff]
  %v1815 = vld [vmem:[%s2 + $0xc8] sm:$0xff]
  %v1816 = vld [vmem:[%s2 + $0xd0] sm:$0xff]
  %v1817 = vld [vmem:[%s2 + $0xd8] sm:$0xff]
  %v1818 = vld [vmem:[%s2 + $0xe0] sm:$0xff]
  %v1819 = vld [vmem:[%s2 + $0xe8] sm:$0xff]
  %v1820 = vld [vmem:[%s2 + $0xf0] sm:$0xff]
  %v1821 = vld [vmem:[%s2 + $0xf8] sm:$0xff]
  %v1822 = vld [vmem:[%s2 + $0x100] sm:$0xff]
  %v1823 = vld [vmem:[%s2 + $0x108] sm:$0xff]
  %v1824 = vld [vmem:[%s2 + $0x110] sm:$0xff]
  %v1825 = vld [vmem:[%s2 + $0x118] sm:$0xff]
  %v1826 = vld [vmem:[%s2 + $0x120] sm:$0xff]
  %v1827 = vld [vmem:[%s2 + $0x128] sm:$0xff]
  %v1828 = vld [vmem:[%s2 + $0x130] sm:$0xff]
  %v1829 = vld [vmem:[%s2 + $0x138] sm:$0xff]
  %v1830 = vld [vmem:[%s2 + $0x140] sm:$0xff]
  %v1831 = vld [vmem:[%s2 + $0x148] sm:$0xff]
  %v1832 = vld [vmem:[%s2 + $0x150] sm:$0xff]
  %v1833 = vld [vmem:[%s2 + $0x158] sm:$0xff]
  %v1834 = vld [vmem:[%s2 + $0x160] sm:$0xff]
  %v1835 = vld [vmem:[%s2 + $0x168] sm:$0xff]
  %v1836 = vld [vmem:[%s2 + $0x170] sm:$0xff]
  %v1837 = vld [vmem:[%s2 + $0x178] sm:$0xff]
  %v1838 = vld [vmem:[%s2 + $0x180] sm:$0xff]
  %v1839 = vld [vmem:[%s2 + $0x188] sm:$0xff]
  %v1840 = vld [vmem:[%s2 + $0x190] sm:$0xff]
  %v1841 = vld [vmem:[%s2 + $0x198] sm:$0xff]
  %v1842 = vld [vmem:[%s2 + $0x1a0] sm:$0xff]
  %v1843 = vld [vmem:[%s2 + $0x1a8] sm:$0xff]
  %v1844 = vld [vmem:[%s2 + $0x1b0] sm:$0xff]
  %v1845 = vld [vmem:[%s2 + $0x1b8] sm:$0xff]
  %v1846 = vld [vmem:[%s2 + $0x1c0] sm:$0xff]
  %v1847 = vld [vmem:[%s2 + $0x1c8] sm:$0xff]
  %v1848 = vld [vmem:[%s2 + $0x1d0] sm:$0xff]
  %v1849 = vld [vmem:[%s2 + $0x1d8] sm:$0xff]
  %v1850 = vld [vmem:[%s2 + $0x1e0] sm:$0xff]
  %v1851 = vld [vmem:[%s2 + $0x1e8] sm:$0xff]
  %v1852 = vld [vmem:[%s2 + $0x1f0] sm:$0xff]
  %v1853 = vld [vmem:[%s2 + $0x1f8] sm:$0xff]
  %1854 = vmatprep.subr.mxu0 %v1791
  %1855 = vmatpush1.msra.mxu0 %v1790
  %1856 = vmatprep.subr.mxu0 %v1795
  %1857 = vmatpush1.msra.mxu0 %v1794
  %1858 = vmatprep.subr.mxu0 %v1799
  %1859 = vmatpush1.msra.mxu0 %v1798
  %1860 = vmatprep.subr.mxu0 %v1803
  %1861 = vmatpush1.msra.mxu0 %v1802
  %1862 = vmatprep.subr.mxu0 %v1807
  %1863 = vmatpush1.msra.mxu0 %v1806
  %1864 = vmatprep.subr.mxu0 %v1811
  %1865 = vmatpush1.msra.mxu0 %v1810
  %1866 = vmatprep.subr.mxu0 %v1815
  %1867 = vmatpush1.msra.mxu0 %v1814
  %1868 = vmatprep.subr.mxu0 %v1819
  %1869 = vmatpush1.msra.mxu0 %v1818
  %1870 = vmatprep.subr.mxu0 %v1823
  %1871 = vmatpush1.msra.mxu0 %v1822
  %1872 = vmatprep.subr.mxu0 %v1827
  %1873 = vmatpush1.msra.mxu0 %v1826
  %1874 = vmatprep.subr.mxu0 %v1831
  %1875 = vmatpush1.msra.mxu0 %v1830
  %1876 = vmatprep.subr.mxu0 %v1835
  %1877 = vmatpush1.msra.mxu0 %v1834
  %1878 = vmatprep.subr.mxu0 %v1839
  %1879 = vmatpush1.msra.mxu0 %v1838
  %1880 = vmatprep.subr.mxu0 %v1843
  %1881 = vmatpush1.msra.mxu0 %v1842
  %1882 = vmatprep.subr.mxu0 %v1847
  %1883 = vmatpush1.msra.mxu0 %v1846
  %1884 = vmatprep.subr.mxu0 %v1851
  %1885 = vmatpush1.msra.mxu0 %v1850
  %1886 = vmatprep.subr.mxu0 0.0
  %1887 = vmatpush1.msra.mxu0 0.0
  %1888 = vmatprep.subr.mxu0 0.0
  %1889 = vmatpush1.msra.mxu0 0.0
  %1890 = vmatprep.subr.mxu0 0.0
  %1891 = vmatpush1.msra.mxu0 0.0
  %1892 = vmatprep.subr.mxu0 0.0
  %1893 = vmatpush1.msra.mxu0 0.0
  %1894 = vmatprep.subr.mxu0 0.0
  %1895 = vmatpush1.msra.mxu0 0.0
  %1896 = vmatprep.subr.mxu0 0.0
  %1897 = vmatpush1.msra.mxu0 0.0
  %1898 = vmatprep.subr.mxu0 0.0
  %1899 = vmatpush1.msra.mxu0 0.0
  %1900 = vmatprep.subr.mxu0 0.0
  %1901 = vmatpush1.msra.mxu0 0.0
  %1902 = vmatprep.subr.mxu0 0.0
  %1903 = vmatpush1.msra.mxu0 0.0
  %1904 = vmatprep.subr.mxu0 0.0
  %1905 = vmatpush1.msra.mxu0 0.0
  %1906 = vmatprep.subr.mxu0 0.0
  %1907 = vmatpush1.msra.mxu0 0.0
  %1908 = vmatprep.subr.mxu0 0.0
  %1909 = vmatpush1.msra.mxu0 0.0
  %1910 = vmatprep.subr.mxu0 0.0
  %1911 = vmatpush1.msra.mxu0 0.0
  %1912 = vmatprep.subr.mxu0 0.0
  %1913 = vmatpush1.msra.mxu0 0.0
  %1914 = vmatprep.subr.mxu0 0.0
  %1915 = vmatpush1.msra.mxu0 0.0
  %1916 = vmatprep.subr.mxu0 0.0
  %1917 = vmatpush1.msra.mxu0 0.0
  %1918 = vmatprep.mubr.f32.mxu0 0.0
  %1919 = vmatmul.mubr.f32.gmra.mrb[0].mxu0 %v1784
  %v1920 = vpop.f32.mrb[0].mxu0
  %v1921 = vadd.f32 0.0, %v1920
  %v1922 = vpop.f32.mrb[0].mxu0
  %v1923 = vadd.f32 0.0, %v1922
  %1924 = vdwg.mxu0
  %1925 = vmatprep.subr.mxu0 %v1793
  %1926 = vmatpush1.msra.mxu0 %v1792
  %1927 = vmatprep.subr.mxu0 %v1797
  %1928 = vmatpush1.msra.mxu0 %v1796
  %1929 = vmatprep.subr.mxu0 %v1801
  %1930 = vmatpush1.msra.mxu0 %v1800
  %1931 = vmatprep.subr.mxu0 %v1805
  %1932 = vmatpush1.msra.mxu0 %v1804
  %1933 = vmatprep.subr.mxu0 %v1809
  %1934 = vmatpush1.msra.mxu0 %v1808
  %1935 = vmatprep.subr.mxu0 %v1813
  %1936 = vmatpush1.msra.mxu0 %v1812
  %1937 = vmatprep.subr.mxu0 %v1817
  %1938 = vmatpush1.msra.mxu0 %v1816
  %1939 = vmatprep.subr.mxu0 %v1821
  %1940 = vmatpush1.msra.mxu0 %v1820
  %1941 = vmatprep.subr.mxu0 %v1825
  %1942 = vmatpush1.msra.mxu0 %v1824
  %1943 = vmatprep.subr.mxu0 %v1829
  %1944 = vmatpush1.msra.mxu0 %v1828
  %1945 = vmatprep.subr.mxu0 %v1833
  %1946 = vmatpush1.msra.mxu0 %v1832
  %1947 = vmatprep.subr.mxu0 %v1837
  %1948 = vmatpush1.msra.mxu0 %v1836
  %1949 = vmatprep.subr.mxu0 %v1841
  %1950 = vmatpush1.msra.mxu0 %v1840
  %1951 = vmatprep.subr.mxu0 %v1845
  %1952 = vmatpush1.msra.mxu0 %v1844
  %1953 = vmatprep.subr.mxu0 %v1849
  %1954 = vmatpush1.msra.mxu0 %v1848
  %1955 = vmatprep.subr.mxu0 %v1853
  %1956 = vmatpush1.msra.mxu0 %v1852
  %1957 = vmatprep.subr.mxu0 0.0
  %1958 = vmatpush1.msra.mxu0 0.0
  %1959 = vmatprep.subr.mxu0 0.0
  %1960 = vmatpush1.msra.mxu0 0.0
  %1961 = vmatprep.subr.mxu0 0.0
  %1962 = vmatpush1.msra.mxu0 0.0
  %1963 = vmatprep.subr.mxu0 0.0
  %1964 = vmatpush1.msra.mxu0 0.0
  %1965 = vmatprep.subr.mxu0 0.0
  %1966 = vmatpush1.msra.mxu0 0.0
  %1967 = vmatprep.subr.mxu0 0.0
  %1968 = vmatpush1.msra.mxu0 0.0
  %1969 = vmatprep.subr.mxu0 0.0
  %1970 = vmatpush1.msra.mxu0 0.0
  %1971 = vmatprep.subr.mxu0 0.0
  %1972 = vmatpush1.msra.mxu0 0.0
  %1973 = vmatprep.subr.mxu0 0.0
  %1974 = vmatpush1.msra.mxu0 0.0
  %1975 = vmatprep.subr.mxu0 0.0
  %1976 = vmatpush1.msra.mxu0 0.0
  %1977 = vmatprep.subr.mxu0 0.0
  %1978 = vmatpush1.msra.mxu0 0.0
  %1979 = vmatprep.subr.mxu0 0.0
  %1980 = vmatpush1.msra.mxu0 0.0
  %1981 = vmatprep.subr.mxu0 0.0
  %1982 = vmatpush1.msra.mxu0 0.0
  %1983 = vmatprep.subr.mxu0 0.0
  %1984 = vmatpush1.msra.mxu0 0.0
  %1985 = vmatprep.subr.mxu0 0.0
  %1986 = vmatpush1.msra.mxu0 0.0
  %1987 = vmatprep.subr.mxu0 0.0
  %1988 = vmatpush1.msra.mxu0 0.0
  %1989 = vmatprep.mubr.f32.mxu0 0.0
  %1990 = vmatmul.mubr.f32.gmra.mrb[0].mxu0 %v1784
  %v1991 = vpop.f32.mrb[0].mxu0
  %v1992 = vadd.f32 0.0, %v1991
  %v1993 = vpop.f32.mrb[0].mxu0
  %v1994 = vadd.f32 0.0, %v1993
  %1995 = vdwg.mxu0
  %v1996 = vadd.f32 %v1786, %v1921
  %v1997 = vadd.f32 %v1787, %v1923
  %v1998 = vadd.f32 %v1788, %v1992
  %v1999 = vadd.f32 %v1789, %v1994
  %v2000 = vxor.u32 %v1996, 2147483648
  %v2001 = vmul.f32 %v2000, 1.442695
  %v2002 = vpow.pop %v2001
  %v2003 = vadd.f32 %v2002, 1.0
  %v2004 = vrcp.pop %v2003
  %v2005 = vmul.f32 1.0, %v2004
  %v2006 = vxor.u32 %v1997, 2147483648
  %v2007 = vmul.f32 %v2006, 1.442695
  %v2008 = vpow.pop %v2007
  %v2009 = vadd.f32 %v2008, 1.0
  %v2010 = vrcp.pop %v2009
  %v2011 = vmul.f32 1.0, %v2010
  %v2012 = vtanh.pop %v1998
  %v2013 = vxor.u32 %v1999, 2147483648
  %v2014 = vmul.f32 %v2013, 1.442695
  %v2015 = vpow.pop %v2014
  %v2016 = vadd.f32 %v2015, 1.0
  %v2017 = vrcp.pop %v2016
  %v2018 = vmul.f32 1.0, %v2017
  %v2019 = vmul.f32 %v2011, %v1782
  %v2020 = vmul.f32 %v2005, %v2012
  %v2021 = vadd.f32 %v2019, %v2020
  %v2022 = vtanh.pop %v2021
  %v2023 = vmul.f32 %v2018, %v2022
  %2024 = vst [vmem:[#allocation3 + $0x30] sm:$0xff] %v2023
  %v2025 = vld [vmem:[#allocation2 + $0xe0] sm:$0xff]
  %v2026 = vld [vmem:[#allocation2 + $0xe8] sm:$0xff]
  %v2027 = vld [vmem:[#allocation2 + $0xf0] sm:$0xff]
  %v2028 = vld [vmem:[#allocation2 + $0xf8] sm:$0xff]
  %v2029 = vld [vmem:[%s2] sm:$0xff]
  %v2030 = vld [vmem:[%s2 + $0x8] sm:$0xff]
  %v2031 = vld [vmem:[%s2 + $0x10] sm:$0xff]
  %v2032 = vld [vmem:[%s2 + $0x18] sm:$0xff]
  %v2033 = vld [vmem:[%s2 + $0x20] sm:$0xff]
  %v2034 = vld [vmem:[%s2 + $0x28] sm:$0xff]
  %v2035 = vld [vmem:[%s2 + $0x30] sm:$0xff]
  %v2036 = vld [vmem:[%s2 + $0x38] sm:$0xff]
  %v2037 = vld [vmem:[%s2 + $0x40] sm:$0xff]
  %v2038 = vld [vmem:[%s2 + $0x48] sm:$0xff]
  %v2039 = vld [vmem:[%s2 + $0x50] sm:$0xff]
  %v2040 = vld [vmem:[%s2 + $0x58] sm:$0xff]
  %v2041 = vld [vmem:[%s2 + $0x60] sm:$0xff]
  %v2042 = vld [vmem:[%s2 + $0x68] sm:$0xff]
  %v2043 = vld [vmem:[%s2 + $0x70] sm:$0xff]
  %v2044 = vld [vmem:[%s2 + $0x78] sm:$0xff]
  %v2045 = vld [vmem:[%s2 + $0x80] sm:$0xff]
  %v2046 = vld [vmem:[%s2 + $0x88] sm:$0xff]
  %v2047 = vld [vmem:[%s2 + $0x90] sm:$0xff]
  %v2048 = vld [vmem:[%s2 + $0x98] sm:$0xff]
  %v2049 = vld [vmem:[%s2 + $0xa0] sm:$0xff]
  %v2050 = vld [vmem:[%s2 + $0xa8] sm:$0xff]
  %v2051 = vld [vmem:[%s2 + $0xb0] sm:$0xff]
  %v2052 = vld [vmem:[%s2 + $0xb8] sm:$0xff]
  %v2053 = vld [vmem:[%s2 + $0xc0] sm:$0xff]
  %v2054 = vld [vmem:[%s2 + $0xc8] sm:$0xff]
  %v2055 = vld [vmem:[%s2 + $0xd0] sm:$0xff]
  %v2056 = vld [vmem:[%s2 + $0xd8] sm:$0xff]
  %v2057 = vld [vmem:[%s2 + $0xe0] sm:$0xff]
  %v2058 = vld [vmem:[%s2 + $0xe8] sm:$0xff]
  %v2059 = vld [vmem:[%s2 + $0xf0] sm:$0xff]
  %v2060 = vld [vmem:[%s2 + $0xf8] sm:$0xff]
  %v2061 = vld [vmem:[%s2 + $0x100] sm:$0xff]
  %v2062 = vld [vmem:[%s2 + $0x108] sm:$0xff]
  %v2063 = vld [vmem:[%s2 + $0x110] sm:$0xff]
  %v2064 = vld [vmem:[%s2 + $0x118] sm:$0xff]
  %v2065 = vld [vmem:[%s2 + $0x120] sm:$0xff]
  %v2066 = vld [vmem:[%s2 + $0x128] sm:$0xff]
  %v2067 = vld [vmem:[%s2 + $0x130] sm:$0xff]
  %v2068 = vld [vmem:[%s2 + $0x138] sm:$0xff]
  %v2069 = vld [vmem:[%s2 + $0x140] sm:$0xff]
  %v2070 = vld [vmem:[%s2 + $0x148] sm:$0xff]
  %v2071 = vld [vmem:[%s2 + $0x150] sm:$0xff]
  %v2072 = vld [vmem:[%s2 + $0x158] sm:$0xff]
  %v2073 = vld [vmem:[%s2 + $0x160] sm:$0xff]
  %v2074 = vld [vmem:[%s2 + $0x168] sm:$0xff]
  %v2075 = vld [vmem:[%s2 + $0x170] sm:$0xff]
  %v2076 = vld [vmem:[%s2 + $0x178] sm:$0xff]
  %v2077 = vld [vmem:[%s2 + $0x180] sm:$0xff]
  %v2078 = vld [vmem:[%s2 + $0x188] sm:$0xff]
  %v2079 = vld [vmem:[%s2 + $0x190] sm:$0xff]
  %v2080 = vld [vmem:[%s2 + $0x198] sm:$0xff]
  %v2081 = vld [vmem:[%s2 + $0x1a0] sm:$0xff]
  %v2082 = vld [vmem:[%s2 + $0x1a8] sm:$0xff]
  %v2083 = vld [vmem:[%s2 + $0x1b0] sm:$0xff]
  %v2084 = vld [vmem:[%s2 + $0x1b8] sm:$0xff]
  %v2085 = vld [vmem:[%s2 + $0x1c0] sm:$0xff]
  %v2086 = vld [vmem:[%s2 + $0x1c8] sm:$0xff]
  %v2087 = vld [vmem:[%s2 + $0x1d0] sm:$0xff]
  %v2088 = vld [vmem:[%s2 + $0x1d8] sm:$0xff]
  %v2089 = vld [vmem:[%s2 + $0x1e0] sm:$0xff]
  %v2090 = vld [vmem:[%s2 + $0x1e8] sm:$0xff]
  %v2091 = vld [vmem:[%s2 + $0x1f0] sm:$0xff]
  %v2092 = vld [vmem:[%s2 + $0x1f8] sm:$0xff]
  %2093 = vmatprep.subr.mxu0 %v2030
  %2094 = vmatpush1.msra.mxu0 %v2029
  %2095 = vmatprep.subr.mxu0 %v2034
  %2096 = vmatpush1.msra.mxu0 %v2033
  %2097 = vmatprep.subr.mxu0 %v2038
  %2098 = vmatpush1.msra.mxu0 %v2037
  %2099 = vmatprep.subr.mxu0 %v2042
  %2100 = vmatpush1.msra.mxu0 %v2041
  %2101 = vmatprep.subr.mxu0 %v2046
  %2102 = vmatpush1.msra.mxu0 %v2045
  %2103 = vmatprep.subr.mxu0 %v2050
  %2104 = vmatpush1.msra.mxu0 %v2049
  %2105 = vmatprep.subr.mxu0 %v2054
  %2106 = vmatpush1.msra.mxu0 %v2053
  %2107 = vmatprep.subr.mxu0 %v2058
  %2108 = vmatpush1.msra.mxu0 %v2057
  %2109 = vmatprep.subr.mxu0 %v2062
  %2110 = vmatpush1.msra.mxu0 %v2061
  %2111 = vmatprep.subr.mxu0 %v2066
  %2112 = vmatpush1.msra.mxu0 %v2065
  %2113 = vmatprep.subr.mxu0 %v2070
  %2114 = vmatpush1.msra.mxu0 %v2069
  %2115 = vmatprep.subr.mxu0 %v2074
  %2116 = vmatpush1.msra.mxu0 %v2073
  %2117 = vmatprep.subr.mxu0 %v2078
  %2118 = vmatpush1.msra.mxu0 %v2077
  %2119 = vmatprep.subr.mxu0 %v2082
  %2120 = vmatpush1.msra.mxu0 %v2081
  %2121 = vmatprep.subr.mxu0 %v2086
  %2122 = vmatpush1.msra.mxu0 %v2085
  %2123 = vmatprep.subr.mxu0 %v2090
  %2124 = vmatpush1.msra.mxu0 %v2089
  %2125 = vmatprep.subr.mxu0 0.0
  %2126 = vmatpush1.msra.mxu0 0.0
  %2127 = vmatprep.subr.mxu0 0.0
  %2128 = vmatpush1.msra.mxu0 0.0
  %2129 = vmatprep.subr.mxu0 0.0
  %2130 = vmatpush1.msra.mxu0 0.0
  %2131 = vmatprep.subr.mxu0 0.0
  %2132 = vmatpush1.msra.mxu0 0.0
  %2133 = vmatprep.subr.mxu0 0.0
  %2134 = vmatpush1.msra.mxu0 0.0
  %2135 = vmatprep.subr.mxu0 0.0
  %2136 = vmatpush1.msra.mxu0 0.0
  %2137 = vmatprep.subr.mxu0 0.0
  %2138 = vmatpush1.msra.mxu0 0.0
  %2139 = vmatprep.subr.mxu0 0.0
  %2140 = vmatpush1.msra.mxu0 0.0
  %2141 = vmatprep.subr.mxu0 0.0
  %2142 = vmatpush1.msra.mxu0 0.0
  %2143 = vmatprep.subr.mxu0 0.0
  %2144 = vmatpush1.msra.mxu0 0.0
  %2145 = vmatprep.subr.mxu0 0.0
  %2146 = vmatpush1.msra.mxu0 0.0
  %2147 = vmatprep.subr.mxu0 0.0
  %2148 = vmatpush1.msra.mxu0 0.0
  %2149 = vmatprep.subr.mxu0 0.0
  %2150 = vmatpush1.msra.mxu0 0.0
  %2151 = vmatprep.subr.mxu0 0.0
  %2152 = vmatpush1.msra.mxu0 0.0
  %2153 = vmatprep.subr.mxu0 0.0
  %2154 = vmatpush1.msra.mxu0 0.0
  %2155 = vmatprep.subr.mxu0 0.0
  %2156 = vmatpush1.msra.mxu0 0.0
  %2157 = vmatprep.mubr.f32.mxu0 0.0
  %2158 = vmatmul.mubr.f32.gmra.mrb[0].mxu0 %v2023
  %v2159 = vpop.f32.mrb[0].mxu0
  %v2160 = vadd.f32 0.0, %v2159
  %v2161 = vpop.f32.mrb[0].mxu0
  %v2162 = vadd.f32 0.0, %v2161
  %2163 = vdwg.mxu0
  %2164 = vmatprep.subr.mxu0 %v2032
  %2165 = vmatpush1.msra.mxu0 %v2031
  %2166 = vmatprep.subr.mxu0 %v2036
  %2167 = vmatpush1.msra.mxu0 %v2035
  %2168 = vmatprep.subr.mxu0 %v2040
  %2169 = vmatpush1.msra.mxu0 %v2039
  %2170 = vmatprep.subr.mxu0 %v2044
  %2171 = vmatpush1.msra.mxu0 %v2043
  %2172 = vmatprep.subr.mxu0 %v2048
  %2173 = vmatpush1.msra.mxu0 %v2047
  %2174 = vmatprep.subr.mxu0 %v2052
  %2175 = vmatpush1.msra.mxu0 %v2051
  %2176 = vmatprep.subr.mxu0 %v2056
  %2177 = vmatpush1.msra.mxu0 %v2055
  %2178 = vmatprep.subr.mxu0 %v2060
  %2179 = vmatpush1.msra.mxu0 %v2059
  %2180 = vmatprep.subr.mxu0 %v2064
  %2181 = vmatpush1.msra.mxu0 %v2063
  %2182 = vmatprep.subr.mxu0 %v2068
  %2183 = vmatpush1.msra.mxu0 %v2067
  %2184 = vmatprep.subr.mxu0 %v2072
  %2185 = vmatpush1.msra.mxu0 %v2071
  %2186 = vmatprep.subr.mxu0 %v2076
  %2187 = vmatpush1.msra.mxu0 %v2075
  %2188 = vmatprep.subr.mxu0 %v2080
  %2189 = vmatpush1.msra.mxu0 %v2079
  %2190 = vmatprep.subr.mxu0 %v2084
  %2191 = vmatpush1.msra.mxu0 %v2083
  %2192 = vmatprep.subr.mxu0 %v2088
  %2193 = vmatpush1.msra.mxu0 %v2087
  %2194 = vmatprep.subr.mxu0 %v2092
  %2195 = vmatpush1.msra.mxu0 %v2091
  %2196 = vmatprep.subr.mxu0 0.0
  %2197 = vmatpush1.msra.mxu0 0.0
  %2198 = vmatprep.subr.mxu0 0.0
  %2199 = vmatpush1.msra.mxu0 0.0
  %2200 = vmatprep.subr.mxu0 0.0
  %2201 = vmatpush1.msra.mxu0 0.0
  %2202 = vmatprep.subr.mxu0 0.0
  %2203 = vmatpush1.msra.mxu0 0.0
  %2204 = vmatprep.subr.mxu0 0.0
  %2205 = vmatpush1.msra.mxu0 0.0
  %2206 = vmatprep.subr.mxu0 0.0
  %2207 = vmatpush1.msra.mxu0 0.0
  %2208 = vmatprep.subr.mxu0 0.0
  %2209 = vmatpush1.msra.mxu0 0.0
  %2210 = vmatprep.subr.mxu0 0.0
  %2211 = vmatpush1.msra.mxu0 0.0
  %2212 = vmatprep.subr.mxu0 0.0
  %2213 = vmatpush1.msra.mxu0 0.0
  %2214 = vmatprep.subr.mxu0 0.0
  %2215 = vmatpush1.msra.mxu0 0.0
  %2216 = vmatprep.subr.mxu0 0.0
  %2217 = vmatpush1.msra.mxu0 0.0
  %2218 = vmatprep.subr.mxu0 0.0
  %2219 = vmatpush1.msra.mxu0 0.0
  %2220 = vmatprep.subr.mxu0 0.0
  %2221 = vmatpush1.msra.mxu0 0.0
  %2222 = vmatprep.subr.mxu0 0.0
  %2223 = vmatpush1.msra.mxu0 0.0
  %2224 = vmatprep.subr.mxu0 0.0
  %2225 = vmatpush1.msra.mxu0 0.0
  %2226 = vmatprep.subr.mxu0 0.0
  %2227 = vmatpush1.msra.mxu0 0.0
  %2228 = vmatprep.mubr.f32.mxu0 0.0
  %2229 = vmatmul.mubr.f32.gmra.mrb[0].mxu0 %v2023
  %v2230 = vpop.f32.mrb[0].mxu0
  %v2231 = vadd.f32 0.0, %v2230
  %v2232 = vpop.f32.mrb[0].mxu0
  %v2233 = vadd.f32 0.0, %v2232
  %2234 = vdwg.mxu0
  %v2235 = vadd.f32 %v2025, %v2160
  %v2236 = vadd.f32 %v2026, %v2162
  %v2237 = vadd.f32 %v2027, %v2231
  %v2238 = vadd.f32 %v2028, %v2233
  %v2239 = vxor.u32 %v2235, 2147483648
  %v2240 = vmul.f32 %v2239, 1.442695
  %v2241 = vpow.pop %v2240
  %v2242 = vadd.f32 %v2241, 1.0
  %v2243 = vrcp.pop %v2242
  %v2244 = vmul.f32 1.0, %v2243
  %v2245 = vxor.u32 %v2236, 2147483648
  %v2246 = vmul.f32 %v2245, 1.442695
  %v2247 = vpow.pop %v2246
  %v2248 = vadd.f32 %v2247, 1.0
  %v2249 = vrcp.pop %v2248
  %v2250 = vmul.f32 1.0, %v2249
  %v2251 = vtanh.pop %v2237
  %v2252 = vxor.u32 %v2238, 2147483648
  %v2253 = vmul.f32 %v2252, 1.442695
  %v2254 = vpow.pop %v2253
  %v2255 = vadd.f32 %v2254, 1.0
  %v2256 = vrcp.pop %v2255
  %v2257 = vmul.f32 1.0, %v2256
  %v2258 = vmul.f32 %v2250, %v2021
  %v2259 = vmul.f32 %v2244, %v2251
  %v2260 = vadd.f32 %v2258, %v2259
  %v2261 = vtanh.pop %v2260
  %v2262 = vmul.f32 %v2257, %v2261
  %2263 = vst [vmem:[#allocation3 + $0x38] sm:$0xff] %v2262
  %v2264 = vld [vmem:[#allocation3] sm:$0xff]
  %v2265 = vld [vmem:[#allocation3 + $0x8] sm:$0xff]
  %v2266 = vld [vmem:[#allocation3 + $0x10] sm:$0xff]
  %v2267 = vld [vmem:[#allocation3 + $0x18] sm:$0xff]
  %v2268 = vld [vmem:[#allocation3 + $0x20] sm:$0xff]
  %v2269 = vld [vmem:[#allocation3 + $0x28] sm:$0xff]
  %v2270 = vld [vmem:[#allocation3 + $0x30] sm:$0xff]
  %v2271 = vld [vmem:[#allocation3 + $0x38] sm:$0xff]
  %v2272 = vld [vmem:[%s4] sm:$0xff]
  %v2273 = vld [vmem:[%s4 + $0x8] sm:$0xff]
  %v2274 = vld [vmem:[%s4 + $0x10] sm:$0xff]
  %v2275 = vld [vmem:[%s4 + $0x18] sm:$0xff]
  %v2276 = vld [vmem:[%s4 + $0x20] sm:$0xff]
  %v2277 = vld [vmem:[%s4 + $0x28] sm:$0xff]
  %v2278 = vld [vmem:[%s4 + $0x30] sm:$0xff]
  %v2279 = vld [vmem:[%s4 + $0x38] sm:$0xff]
  %v2280 = vld [vmem:[%s4 + $0x40] sm:$0xff]
  %v2281 = vld [vmem:[%s4 + $0x48] sm:$0xff]
  %v2282 = vld [vmem:[%s4 + $0x50] sm:$0xff]
  %v2283 = vld [vmem:[%s4 + $0x58] sm:$0xff]
  %v2284 = vld [vmem:[%s4 + $0x60] sm:$0xff]
  %v2285 = vld [vmem:[%s4 + $0x68] sm:$0xff]
  %v2286 = vld [vmem:[%s4 + $0x70] sm:$0xff]
  %v2287 = vld [vmem:[%s4 + $0x78] sm:$0xff]
  %v2288 = vld [vmem:[%s5] sm:$0x1]
  %v2290 = vlaneseq
  %v2291 = vshrl.u32 %v2290, 7
  %v2292 = vsub.s32 0, %v2291
  %v2293 = vrot.slane %v2288, %v2292
  %2295 = vmatprep.subr.mxu0 0.0
  %2296 = vmatpush1.msra.mxu0 %v2272
  %2297 = vmatprep.subr.mxu0 0.0
  %2298 = vmatpush1.msra.mxu0 %v2273
  %2299 = vmatprep.subr.mxu0 0.0
  %2300 = vmatpush1.msra.mxu0 %v2274
  %2301 = vmatprep.subr.mxu0 0.0
  %2302 = vmatpush1.msra.mxu0 %v2275
  %2303 = vmatprep.subr.mxu0 0.0
  %2304 = vmatpush1.msra.mxu0 %v2276
  %2305 = vmatprep.subr.mxu0 0.0
  %2306 = vmatpush1.msra.mxu0 %v2277
  %2307 = vmatprep.subr.mxu0 0.0
  %2308 = vmatpush1.msra.mxu0 %v2278
  %2309 = vmatprep.subr.mxu0 0.0
  %2310 = vmatpush1.msra.mxu0 %v2279
  %2311 = vmatprep.subr.mxu0 0.0
  %2312 = vmatpush1.msra.mxu0 %v2280
  %2313 = vmatprep.subr.mxu0 0.0
  %2314 = vmatpush1.msra.mxu0 %v2281
  %2315 = vmatprep.subr.mxu0 0.0
  %2316 = vmatpush1.msra.mxu0 %v2282
  %2317 = vmatprep.subr.mxu0 0.0
  %2318 = vmatpush1.msra.mxu0 %v2283
  %2319 = vmatprep.subr.mxu0 0.0
  %2320 = vmatpush1.msra.mxu0 %v2284
  %2321 = vmatprep.subr.mxu0 0.0
  %2322 = vmatpush1.msra.mxu0 %v2285
  %2323 = vmatprep.subr.mxu0 0.0
  %2324 = vmatpush1.msra.mxu0 %v2286
  %2325 = vmatprep.subr.mxu0 0.0
  %2326 = vmatpush1.msra.mxu0 %v2287
  %2327 = vmatprep.subr.mxu0 0.0
  %2328 = vmatpush1.msra.mxu0 0.0
  %2329 = vmatprep.subr.mxu0 0.0
  %2330 = vmatpush1.msra.mxu0 0.0
  %2331 = vmatprep.subr.mxu0 0.0
  %2332 = vmatpush1.msra.mxu0 0.0
  %2333 = vmatprep.subr.mxu0 0.0
  %2334 = vmatpush1.msra.mxu0 0.0
  %2335 = vmatprep.subr.mxu0 0.0
  %2336 = vmatpush1.msra.mxu0 0.0
  %2337 = vmatprep.subr.mxu0 0.0
  %2338 = vmatpush1.msra.mxu0 0.0
  %2339 = vmatprep.subr.mxu0 0.0
  %2340 = vmatpush1.msra.mxu0 0.0
  %2341 = vmatprep.subr.mxu0 0.0
  %2342 = vmatpush1.msra.mxu0 0.0
  %2343 = vmatprep.subr.mxu0 0.0
  %2344 = vmatpush1.msra.mxu0 0.0
  %2345 = vmatprep.subr.mxu0 0.0
  %2346 = vmatpush1.msra.mxu0 0.0
  %2347 = vmatprep.subr.mxu0 0.0
  %2348 = vmatpush1.msra.mxu0 0.0
  %2349 = vmatprep.subr.mxu0 0.0
  %2350 = vmatpush1.msra.mxu0 0.0
  %2351 = vmatprep.subr.mxu0 0.0
  %2352 = vmatpush1.msra.mxu0 0.0
  %2353 = vmatprep.subr.mxu0 0.0
  %2354 = vmatpush1.msra.mxu0 0.0
  %2355 = vmatprep.subr.mxu0 0.0
  %2356 = vmatpush1.msra.mxu0 0.0
  %2357 = vmatprep.subr.mxu0 0.0
  %2358 = vmatpush1.msra.mxu0 0.0
  %2359 = vmatprep.mubr.f32.mxu0 0.0
  %2360 = vmatmul.mubr.f32.gmra.mrb[0].mxu0 %v2264
  %v2361 = vpop.f32.mrb[0].mxu0
  %v2362 = vadd.f32 %v2293, %v2361
  %v2363 = vpop.f32.mrb[0].mxu0
  %2364 = vmatprep.mubr.f32.mxu0 0.0
  %2365 = vmatmul.mubr.f32.gmra.mrb[0].mxu0 %v2265
  %v2366 = vpop.f32.mrb[0].mxu0
  %v2367 = vadd.f32 %v2293, %v2366
  %v2368 = vpop.f32.mrb[0].mxu0
  %2369 = vmatprep.mubr.f32.mxu0 0.0
  %2370 = vmatmul.mubr.f32.gmra.mrb[0].mxu0 %v2266
  %v2371 = vpop.f32.mrb[0].mxu0
  %v2372 = vadd.f32 %v2293, %v2371
  %v2373 = vpop.f32.mrb[0].mxu0
  %2374 = vmatprep.mubr.f32.mxu0 0.0
  %2375 = vmatmul.mubr.f32.gmra.mrb[0].mxu0 %v2267
  %v2376 = vpop.f32.mrb[0].mxu0
  %v2377 = vadd.f32 %v2293, %v2376
  %v2378 = vpop.f32.mrb[0].mxu0
  %2379 = vmatprep.mubr.f32.mxu0 0.0
  %2380 = vmatmul.mubr.f32.gmra.mrb[0].mxu0 %v2268
  %v2381 = vpop.f32.mrb[0].mxu0
  %v2382 = vadd.f32 %v2293, %v2381
  %v2383 = vpop.f32.mrb[0].mxu0
  %2384 = vmatprep.mubr.f32.mxu0 0.0
  %2385 = vmatmul.mubr.f32.gmra.mrb[0].mxu0 %v2269
  %v2386 = vpop.f32.mrb[0].mxu0
  %v2387 = vadd.f32 %v2293, %v2386
  %v2388 = vpop.f32.mrb[0].mxu0
  %2389 = vmatprep.mubr.f32.mxu0 0.0
  %2390 = vmatmul.mubr.f32.gmra.mrb[0].mxu0 %v2270
  %v2391 = vpop.f32.mrb[0].mxu0
  %v2392 = vadd.f32 %v2293, %v2391
  %v2393 = vpop.f32.mrb[0].mxu0
  %2394 = vmatprep.mubr.f32.mxu0 0.0
  %2395 = vmatmul.mubr.f32.gmra.mrb[0].mxu0 %v2271
  %v2396 = vpop.f32.mrb[0].mxu0
  %v2397 = vadd.f32 %v2293, %v2396
  %v2398 = vpop.f32.mrb[0].mxu0
  %2399 = vdwg.mxu0
  %2400 = vst.msk [vmem:[%s6] sm:$0xff] %vm69, %v2362
  %2401 = vst.msk [vmem:[%s6 + $0x8] sm:$0xff] %vm69, %v2367
  %2402 = vst.msk [vmem:[%s6 + $0x10] sm:$0xff] %vm69, %v2372
  %2403 = vst.msk [vmem:[%s6 + $0x18] sm:$0xff] %vm69, %v2377
  %2404 = vst.msk [vmem:[%s6 + $0x20] sm:$0xff] %vm69, %v2382
  %2405 = vst.msk [vmem:[%s6 + $0x28] sm:$0xff] %vm69, %v2387
  %2406 = vst.msk [vmem:[%s6 + $0x30] sm:$0xff] %vm69, %v2392
  %2407 = vst.msk [vmem:[%s6 + $0x38] sm:$0xff] %vm69, %v2397
  // Predicated region
  $region26: #{rnn_lstm_forward.1} parent=0 // pred_check
    _
  $region27: #{rnn_lstm_forward.1} parent=0 // pred_check_branch
    %2409 = sbr.rel (0) target = $region29
  $region28: #{rnn_lstm_forward.1} parent=0 // pred_region
    _
  $region29: #{rnn_lstm_forward.1} parent=0 // pred_fallthru
    _
  // Predicated region
  $region30: #{rnn_lstm_forward.1} parent=0 // pred_check
    _
  $region31: #{rnn_lstm_forward.1} parent=0 // pred_check_branch
    %2411 = sbr.rel (0) target = $region33
  $region32: #{rnn_lstm_forward.1} parent=0 // pred_region
    _
  $region33: #{rnn_lstm_forward.1} parent=0 // pred_fallthru
    _

</llo_original>
